<compile_context>
chip_gen: v7x
topology: tpu7x:2x2x1
jax: 0.10.0
libtpu: 0.0.40
codegen_flags: <defaults>
</compile_context>

<pallas_src>
import functools
import math

import jax
import jax.numpy as jnp
from jax.experimental import pallas as pl
from jax.experimental.pallas import tpu as pltpu

_MAX_TILE_S = 4096  # rows per grid step (output block stays a few MiB at realistic dims)


def _rope_cache_kernel(params_ref, out_ref):
    """Writes one (tile_s, W) tile of the packed cache: lanes [cos(emb) | sin(emb) | pad].

    params_ref row 0: inv_freq replicated across the full padded lane width
                      (pad lanes are 0).
    params_ref row 1: phase per lane (0 for the cos lanes, pi/2 for the sin lanes),
                      so the whole tile is ONE full-lane-width cos evaluation:
                          out = cos(pos * inv_freq_full - phase)
    """
    tile_s = out_ref.shape[0]
    i = pl.program_id(0)

    # Absolute positions for this tile: (tile_s, 1). int32 iota -> f32 (exact < 2^24).
    pos = (i * tile_s
           + jax.lax.broadcasted_iota(jnp.int32, (tile_s, 1), 0)).astype(jnp.float32)

    inv_f = params_ref[0:1, :]   # (1, W) — resident in VMEM across all grid steps
    phase = params_ref[1:2, :]   # (1, W)

    # Single fused transcendental per output element, full lane utilization.
    out_ref[...] = jnp.cos(pos * inv_f - phase).astype(out_ref.dtype)


def _choose_tile_s(seq_len, width_pad):
    """Pick a fat sequence tile; keep the step count even when multi-step (v7x)."""
    seq8 = int(pl.cdiv(seq_len, 8)) * 8
    # Rows such that a double-buffered f32 output block stays around <= 8 MiB.
    budget_rows = max(8, (((8 << 20) // (2 * 4 * width_pad)) // 8) * 8)
    tile = min(seq8, _MAX_TILE_S, budget_rows)
    if tile >= seq8:
        return seq8  # single fat tile: no per-step overhead
    n_steps = int(pl.cdiv(seq8, tile))
    if n_steps % 2:
        n_steps += 1  # even step count so v7x's two TCs split the parallel axis evenly
    tile = int(pl.cdiv(seq8, n_steps))
    return max(8, int(pl.cdiv(tile, 8)) * 8)


@functools.partial(jax.jit, static_argnames=("seq_len", "emb_w", "out_dtype"))
def _build_cos_sin_cache(params, *, seq_len, emb_w, out_dtype):
    """Returns (cos, sin) caches of shape (seq_len, emb_w) in out_dtype.

    params: (2, width_pad) f32 — row 0 replicated inv_freq, row 1 phase.
    """
    width_pad = params.shape[1]
    tile_s = _choose_tile_s(seq_len, width_pad)
    seq_pad = int(pl.cdiv(seq_len, tile_s)) * tile_s
    grid = (seq_pad // tile_s,)

    packed = pl.pallas_call(
        _rope_cache_kernel,
        out_shape=jax.ShapeDtypeStruct((seq_pad, width_pad), out_dtype),
        grid_spec=pltpu.PrefetchScalarGridSpec(
            num_scalar_prefetch=0,
            grid=grid,
            # Full-array block: the tiny (2, W) param table is DMA'd once and stays
            # resident in VMEM across all grid steps.
            in_specs=[pl.BlockSpec((2, width_pad), lambda i: (0, 0))],
            # Lane-dense output (width_pad is a multiple of 128) -> unmasked vst.
            out_specs=pl.BlockSpec((tile_s, width_pad), lambda i: (i, 0)),
        ),
        compiler_params=pltpu.CompilerParams(
            dimension_semantics=("parallel",)),
    )(params)

    cos = packed[:seq_len, :emb_w]
    sin = packed[:seq_len, emb_w:2 * emb_w]
    return cos, sin


class RotaryEmbedding:
    """JAX/Pallas port of the PyTorch RotaryEmbedding module."""

    def __init__(self, dim, max_position_embeddings=2048, base=10000):
        self.dim = dim
        self.max_position_embeddings = max_position_embeddings
        self.base = base

        # Exact inv_freq (same formula as the PyTorch buffer).
        self.inv_freq = 1.0 / (
            self.base ** (jnp.arange(0, self.dim, 2, dtype=jnp.float32) / self.dim)
        )
        half = int(self.inv_freq.shape[0])          # len(arange(0, dim, 2))
        self._emb_w = 2 * half                      # width of emb = cat(freqs, freqs)
        width = 4 * half                            # packed [cos | sin]
        width_pad = int(pl.cdiv(width, 128)) * 128  # lane-dense padded width

        inv_full = jnp.zeros((width_pad,), jnp.float32).at[:width].set(
            jnp.tile(self.inv_freq, 4))
        phase = jnp.zeros((width_pad,), jnp.float32).at[2 * half:width].set(
            jnp.float32(math.pi / 2.0))
        self._params = jnp.stack([inv_full, phase])  # (2, width_pad)

        self._cache_dtype = jnp.dtype(jnp.float32)   # torch default dtype
        self._set_cos_sin_cache(seq_len=max_position_embeddings,
                                dtype=self._cache_dtype)

    def _set_cos_sin_cache(self, seq_len, dtype):
        self.max_seq_len_cached = seq_len
        self._cache_dtype = jnp.dtype(dtype)
        self.cos_cached, self.sin_cached = _build_cos_sin_cache(
            self._params, seq_len=seq_len, emb_w=self._emb_w,
            out_dtype=self._cache_dtype)
        # Per-dtype memo; invalidated on rebuild.
        self._dtype_cache = {self._cache_dtype: (self.cos_cached, self.sin_cached)}

    def _typed_cache(self, dtype):
        dtype = jnp.dtype(dtype)
        entry = self._dtype_cache.get(dtype)
        if entry is None:
            if self._cache_dtype == jnp.dtype(jnp.float32):
                # Build directly in the requested dtype inside the kernel
                # (bit-identical to casting the f32 cache, without the full-cache
                # HBM read/write of an astype).
                entry = _build_cos_sin_cache(
                    self._params, seq_len=self.max_seq_len_cached,
                    emb_w=self._emb_w, out_dtype=dtype)
            else:
                # Cache was rebuilt in a narrower dtype: match torch's upcast semantics.
                entry = (self.cos_cached.astype(dtype), self.sin_cached.astype(dtype))
            self._dtype_cache[dtype] = entry
        return entry

    def __call__(self, x, seq_len=None):
        if seq_len is None:
            # PyTorch original would raise on None; default to the sequence axis of x.
            seq_len = x.shape[-2]
        if seq_len > self.max_seq_len_cached:
            self._set_cos_sin_cache(seq_len=seq_len, dtype=jnp.dtype(x.dtype))
        cos, sin = self._typed_cache(jnp.dtype(x.dtype))
        return cos[:seq_len], sin[:seq_len]


if __name__ == "__main__":
    key = jax.random.PRNGKey(0)
    batch, heads, seq, dim = 2, 4, 8, 64
    x = jax.random.normal(key, (batch, heads, seq, dim), dtype=jnp.float32)

    rope = RotaryEmbedding(dim=dim, max_position_embeddings=128, base=10000)
    cos, sin = rope(x, seq_len=seq)
    cos = jax.block_until_ready(cos)
    sin = jax.block_until_ready(sin)

    # Sanity check against a pure-JAX reference.
    t = jnp.arange(seq, dtype=jnp.float32)
    freqs = jnp.outer(t, rope.inv_freq)
    emb = jnp.concatenate([freqs, freqs], axis=-1)
    assert cos.shape == (seq, dim) and sin.shape == (seq, dim)
    assert jnp.allclose(cos, jnp.cos(emb), atol=1e-5)
    assert jnp.allclose(sin, jnp.sin(emb), atol=1e-5)

    # Full-cache check (exact inv_freq now; only ~ULP phase error from sin == shifted cos).
    t_full = jnp.arange(rope.max_seq_len_cached, dtype=jnp.float32)
    emb_full = jnp.concatenate([jnp.outer(t_full, rope.inv_freq)] * 2, axis=-1)
    assert jnp.allclose(rope.cos_cached, jnp.cos(emb_full), atol=1e-4)
    assert jnp.allclose(rope.sin_cached, jnp.sin(emb_full), atol=1e-4)

    # Default seq_len (None) path and direct-in-kernel bf16 build (no full-cache cast).
    cos_d, sin_d = rope(x)
    assert cos_d.shape == (seq, dim)
    cos_bf16, sin_bf16 = rope(x.astype(jnp.bfloat16), seq_len=seq)
    cos_bf16 = jax.block_until_ready(cos_bf16)
    assert cos_bf16.dtype == jnp.bfloat16 and sin_bf16.dtype == jnp.bfloat16
    assert jnp.allclose(cos_bf16.astype(jnp.float32), jnp.cos(emb), atol=1e-2)

    # Non-128-multiple head dim exercises the lane-padded output path (192 -> 256 lanes).
    rope96 = RotaryEmbedding(dim=96, max_position_embeddings=32, base=10000)
    x96 = jax.random.normal(key, (1, 2, 16, 96), dtype=jnp.float32)
    c96, s96 = rope96(x96, seq_len=16)
    c96 = jax.block_until_ready(c96)
    t96 = jnp.arange(16, dtype=jnp.float32)
    emb96 = jnp.concatenate([jnp.outer(t96, rope96.inv_freq)] * 2, axis=-1)
    assert c96.shape == (16, 96) and s96.shape == (16, 96)
    assert jnp.allclose(c96, jnp.cos(emb96), atol=1e-5)
    assert jnp.allclose(s96, jnp.sin(emb96), atol=1e-5)

    print("KERNEL_OK")
</pallas_src>

<mosaic_0001>
module attributes {stable_mosaic.version = 11 : i64} {
  func.func @_rope_cache_kernel(%arg0: i32, %arg1: memref<2x128xf32, #tpu.memory_space<vmem>>, %arg2: memref<128x128xf32, #tpu.memory_space<vmem>>) attributes {dimension_semantics = [#tpu.dimension_semantics<parallel>], iteration_bounds = array<i64: 1>, scalar_prefetch = 0 : i64, scratch_operands = 0 : i64, tpu.core_type = #tpu.core_type<tc>, window_params = [{pipeline_mode = #tpu.pipeline_mode<synchronous>, transform_indices = @transform_0, window_bounds = array<i64: 2, 128>}, {transform_indices = @transform_1, window_bounds = array<i64: 128, 128>}]} {
    %c128_i32 = arith.constant 128 : i32
    %0 = arith.muli %arg0, %c128_i32 : i32
    %1 = tpu.iota {dimensions = array<i32: 0>} : vector<128x1xi32>
    %2 = vector.broadcast %0 : i32 to vector<128x1xi32>
    %3 = arith.addi %2, %1 : vector<128x1xi32>
    %4 = arith.sitofp %3 : vector<128x1xi32> to vector<128x1xf32>
    %c0 = arith.constant 0 : index
    %c0_0 = arith.constant 0 : index
    %5 = vector.load %arg1[%c0, %c0_0] : memref<2x128xf32, #tpu.memory_space<vmem>>, vector<1x128xf32>
    %c1 = arith.constant 1 : index
    %c0_1 = arith.constant 0 : index
    %6 = vector.load %arg1[%c1, %c0_1] : memref<2x128xf32, #tpu.memory_space<vmem>>, vector<1x128xf32>
    %7 = vector.broadcast %4 : vector<128x1xf32> to vector<128x128xf32>
    %8 = vector.broadcast %5 : vector<1x128xf32> to vector<128x128xf32>
    %9 = arith.mulf %7, %8 : vector<128x128xf32>
    %10 = vector.broadcast %6 : vector<1x128xf32> to vector<128x128xf32>
    %11 = arith.subf %9, %10 : vector<128x128xf32>
    %12 = math.cos %11 : vector<128x128xf32>
    %c0_2 = arith.constant 0 : index
    %c0_3 = arith.constant 0 : index
    %13 = vector.load %arg2[%c0_2, %c0_3] : memref<128x128xf32, #tpu.memory_space<vmem>>, vector<128x128xf32>
    tpu.vector_store %arg2[%c0_2, %c0_3], %12 {strides = array<i32>} : memref<128x128xf32, #tpu.memory_space<vmem>>, vector<128x128xf32>,
    return
  }
  func.func @transform_0(%arg0: i32) -> (i32, i32) {
    %c0_i32 = arith.constant 0 : i32
    %c0_i32_0 = arith.constant 0 : i32
    %c0_i32_1 = arith.constant 0 : i32
    return %c0_i32, %c0_i32_0 : i32, i32
  }
  func.func @transform_1(%arg0: i32) -> (i32, i32) {
    %c0_i32 = arith.constant 0 : i32
    %c0_i32_0 = arith.constant 0 : i32
    return %arg0, %c0_i32 : i32, i32
  }
}

</mosaic_0001>

<llo_original>
// kernel: _build_cos_sin_cache.1
$region0: #{_build_cos_sin_cache.1}
  #allocation0 [shape = 'u32[]', space=smem, size = 0x4, offset = 0x4, fixed_abs, tag = 'smem constant byte address 0x4 - core index']
  #allocation1 [shape = 'u32[144,128]{1,0:T(1,128)}', space=vmem, size = 0x12000, scoped, tag = 'internal scratch']
  %s0 = inlined_call_operand.hbm [shape: f32[2,128], index: 0, kind: input, shape index: {}]
  %s1 = inlined_call_operand.vmem [shape: f32[128,128], index: 1, kind: output, shape index: {}]
  %s2 = sld [smem:[#allocation0]]
  $region18: #{_build_cos_sin_cache.1} parent=0
    _
  %s4 = ssub.s32 1, %s2
  %s5 = scalar_select 0, %s4, %s2
  $region1: #{_build_cos_sin_cache.1} parent=0
    #allocation2 [shape = 'u8[1024]{0}', space=vmem, size = 0x400, scoped, tag = 'input window, operand 0, single buffered']
    #allocation3 [shape = 's32[1]{0}', space=sflag, size = 0x4, scoped, tag = 'scoped memory for _build_cos_sin_cache.1']
    %6 = vsyncpa [#allocation3], 0
    // Predicated region
    $region2: #{_build_cos_sin_cache.1} parent=1 // pred_check
      _
    $region3: #{_build_cos_sin_cache.1} parent=1 // pred_check_branch
      %8 = sbr.rel (0) target = $region5
    $region4: #{_build_cos_sin_cache.1} parent=1 // pred_region
      %s10 = ssub.s32 32, 32
      %11 = vsyncadd [#allocation3], %s10
      %s13 = sshll.u32 [#allocation2], 4
      %s14 = int_to_ptr.vmem [resolvable:$true] %s13
      %16 = dma.hbm_to_vmem [thread:$0]  %s0, 32, %s14, [#allocation3]
    $region5: #{_build_cos_sin_cache.1} parent=1 // pred_fallthru
      _
    // Predicated region
    $region6: #{_build_cos_sin_cache.1} parent=1 // pred_check
      _
    $region7: #{_build_cos_sin_cache.1} parent=1 // pred_check_branch
      %18 = sbr.rel (0) target = $region9
    $region8: #{_build_cos_sin_cache.1} parent=1 // pred_region
      %19 = dma.done [#allocation3], 32
    $region9: #{_build_cos_sin_cache.1} parent=1 // pred_fallthru
      _
    %s20 = smul.u32 0, 128
    %v21 = vlaneseq
    %v22 = vshrl.u32 %v21, 7
    %v23 = vadd.s32 %v22, 8
    %v24 = vadd.s32 %v22, 16
    %v25 = vadd.s32 %v22, 24
    %v26 = vadd.s32 %v22, 32
    %v27 = vadd.s32 %v22, 40
    %v28 = vadd.s32 %v22, 48
    %v29 = vadd.s32 %v22, 56
    %v30 = vadd.s32 %v22, 64
    %v31 = vadd.s32 %v22, 72
    %v32 = vadd.s32 %v22, 80
    %v33 = vadd.s32 %v22, 88
    %v34 = vadd.s32 %v22, 96
    %v35 = vadd.s32 %v22, 104
    %v36 = vadd.s32 %v22, 112
    %v37 = vadd.s32 %v22, 120
    %v38 = vstv %s20
    %v39 = vadd.s32 %v38, %v22
    %v40 = vadd.s32 %v38, %v23
    %v41 = vadd.s32 %v38, %v24
    %v42 = vadd.s32 %v38, %v25
    %v43 = vadd.s32 %v38, %v26
    %v44 = vadd.s32 %v38, %v27
    %v45 = vadd.s32 %v38, %v28
    %v46 = vadd.s32 %v38, %v29
    %v47 = vadd.s32 %v38, %v30
    %v48 = vadd.s32 %v38, %v31
    %v49 = vadd.s32 %v38, %v32
    %v50 = vadd.s32 %v38, %v33
    %v51 = vadd.s32 %v38, %v34
    %v52 = vadd.s32 %v38, %v35
    %v53 = vadd.s32 %v38, %v36
    %v54 = vadd.s32 %v38, %v37
    %v55 = vcvt.s32.f32 %v39
    %v56 = vcvt.s32.f32 %v40
    %v57 = vcvt.s32.f32 %v41
    %v58 = vcvt.s32.f32 %v42
    %v59 = vcvt.s32.f32 %v43
    %v60 = vcvt.s32.f32 %v44
    %v61 = vcvt.s32.f32 %v45
    %v62 = vcvt.s32.f32 %v46
    %v63 = vcvt.s32.f32 %v47
    %v64 = vcvt.s32.f32 %v48
    %v65 = vcvt.s32.f32 %v49
    %v66 = vcvt.s32.f32 %v50
    %v67 = vcvt.s32.f32 %v51
    %v68 = vcvt.s32.f32 %v52
    %v69 = vcvt.s32.f32 %v53
    %v70 = vcvt.s32.f32 %v54
    %v71 = vld [vmem:[#allocation2] sm:$0x1]
    %v72 = vld [vmem:[#allocation2 + $0x1] sm:$0x1]
    %v73 = vlaneseq
    %v74 = vshrl.u32 %v73, 7
    %v75 = vsub.s32 0, %v74
    %v76 = vrot.slane %v71, %v75
    %v77 = vmul.f32 %v55, %v76
    %v78 = vmul.f32 %v56, %v76
    %v79 = vmul.f32 %v57, %v76
    %v80 = vmul.f32 %v58, %v76
    %v81 = vmul.f32 %v59, %v76
    %v82 = vmul.f32 %v60, %v76
    %v83 = vmul.f32 %v61, %v76
    %v84 = vmul.f32 %v62, %v76
    %v85 = vmul.f32 %v63, %v76
    %v86 = vmul.f32 %v64, %v76
    %v87 = vmul.f32 %v65, %v76
    %v88 = vmul.f32 %v66, %v76
    %v89 = vmul.f32 %v67, %v76
    %v90 = vmul.f32 %v68, %v76
    %v91 = vmul.f32 %v69, %v76
    %v92 = vmul.f32 %v70, %v76
    %v93 = vlaneseq
    %v94 = vshrl.u32 %v93, 7
    %v95 = vsub.s32 0, %v94
    %v96 = vrot.slane %v72, %v95
    %v97 = vsub.f32 %v77, %v96
    %v98 = vsub.f32 %v78, %v96
    %v99 = vsub.f32 %v79, %v96
    %v100 = vsub.f32 %v80, %v96
    %v101 = vsub.f32 %v81, %v96
    %v102 = vsub.f32 %v82, %v96
    %v103 = vsub.f32 %v83, %v96
    %v104 = vsub.f32 %v84, %v96
    %v105 = vsub.f32 %v85, %v96
    %v106 = vsub.f32 %v86, %v96
    %v107 = vsub.f32 %v87, %v96
    %v108 = vsub.f32 %v88, %v96
    %v109 = vsub.f32 %v89, %v96
    %v110 = vsub.f32 %v90, %v96
    %v111 = vsub.f32 %v91, %v96
    %v112 = vsub.f32 %v92, %v96
    %v113 = vand.u32 2147483647, %v97
    %vm114 = vcmp.le.f32.partialorder %v113, 0.7853982
    %vm115 = vcmp.lt.s32.totalorder %v97, 0
    %v116 = vand.u32 %v97, 2139095040
    %v117 = vshrl.u32 %v116, 23
    %v118 = vsub.s32 %v117, 127
    %v119 = vand.u32 2147483647, %v97
    %v120 = vand.u32 %v119, 8388607
    %v121 = vor.u32 %v120, 8388608
    %v122 = vsub.s32 0, %v121
    %v123 = vadd.s32 %v118, 1
    %vm124 = vcmp.gt.s32.totalorder %v123, 0
    %v125 = vsel %vm124, %v123, 0
    %v126 = vshrl.u32 %v125, 5
    %v127 = vand.u32 %v125, 31
    %v128 = vsub.s32 32, %v127
    %v129 = vshrl.u32 683565275, %v128
    %v130 = vshll.u32 683565275, %v127
    %v131 = vshrl.u32 2475754826, %v128
    %v132 = vor.u32 %v130, %v131
    %v133 = vshll.u32 2475754826, %v127
    %v134 = vshrl.u32 2131351028, %v128
    %v135 = vor.u32 %v133, %v134
    %v136 = vshll.u32 2131351028, %v127
    %v137 = vshrl.u32 2102212464, %v128
    %v138 = vor.u32 %v136, %v137
    %v139 = vshll.u32 2102212464, %v127
    %v140 = vshrl.u32 920167782, %v128
    %v141 = vor.u32 %v139, %v140
    %v142 = vshll.u32 920167782, %v127
    %v143 = vshrl.u32 1326507024, %v128
    %v144 = vor.u32 %v142, %v143
    %vm145 = vcmp.lt.s32.totalorder %v126, 1
    %vm146 = vcmp.lt.s32.totalorder %v126, 2
    %vm147 = vcmp.lt.s32.totalorder %v126, 3
    %vm148 = vcmp.lt.s32.totalorder %v126, 4
    %v149 = vsel %vm145, %v129, %v132
    %v150 = vsel %vm148, %v138, 2102212464
    %v151 = vsel %vm147, %v135, %v150
    %v152 = vsel %vm146, %v149, %v151
    %v153 = vsel %vm145, %v132, %v135
    %v154 = vsel %vm148, %v141, 920167782
    %v155 = vsel %vm147, %v138, %v154
    %v156 = vsel %vm146, %v153, %v155
    %v157 = vsel %vm145, %v135, %v138
    %v158 = vsel %vm148, %v144, 1326507024
    %v159 = vsel %vm147, %v141, %v158
    %v160 = vsel %vm146, %v157, %v159
    %v161 = vshll.u32 %v121, 8
    %v162 = vmul.u32.u64.compose %v161, %v160
    %v163 = vextract.low.u32 %v162
    %v164 = vextract.high.u32 %v162
    %v165 = vmul.u32.u64.compose %v161, %v156
    %v166 = vextract.low.u32 %v165
    %v167 = vextract.high.u32 %v165
    %v168 = vmul.u32 %v161, %v152
    %v169 = vadd.s32 %v164, %v166
    %vm170 = vc.u32 %v164, %v166
    %v171 = vadd.s32 %v167, 1
    %v172 = vsel %vm170, %v171, %v167
    %v173 = vadd.s32 %v168, %v172
    %v174 = vadd.s32 %v173, 536870912
    %v175 = vshrl.u32 %v174, 30
    %v176 = vshll.u32 %v175, 30
    %v177 = vsub.s32 %v173, %v176
    %vm178 = vcmp.lt.s32.totalorder %v177, 0
    %v179 = vsub.s32 0, %v177
    %v180 = vsel %vm178, %v179, %v177
    %v181 = vclz %v180
    %v182 = vsub.s32 %v181, 2
    %vm183 = vcmp.gt.s32.totalorder 0, %v182
    %v184 = vsel %vm183, 0, %v182
    %v185 = vsub.s32 32, %v184
    %v186 = vshll.u32 %v177, %v184
    %v187 = vshrl.u32 %v169, %v185
    %v188 = vor.u32 %v186, %v187
    %v189 = vsub.s32 4294967266, %v184
    %v190 = vadd.s32 %v189, 127
    %v191 = vshll.u32 %v190, 23
    %v192 = vor.u32 4788187, %v191
    %v193 = vand.u32 2147483647, %v192
    %v195 = vcvt.s32.f32 %v188
    %v196 = vmul.f32 %v195, %v193
    %v197 = vxor.u32 %v196, 2147483648
    %v198 = vsel %vm115, %v197, %v196
    %v199 = vsub.s32 4, %v175
    %v200 = vsel %vm115, %v199, %v175
    %v201 = vsel %vm114, %v97, %v198
    %v202 = vsel %vm114, 0, %v200
    %v203 = vcosq.f32.pop %v201
    %v204 = vsinq.f32.pop %v201
    %vm205 = vweird.f32 %v97
    %v206 = vand.u32 %v202, 3
    %vm207 = vcmp.lt.s32.totalorder %v206, 2
    %vm208 = vcmp.eq.s32.totalorder %v206, 0
    %v209 = vxor.u32 %v204, 2147483648
    %v210 = vsel %vm208, %v203, %v209
    %vm211 = vcmp.eq.s32.totalorder %v206, 2
    %v212 = vxor.u32 %v203, 2147483648
    %v213 = vsel %vm211, %v212, %v204
    %v214 = vsel %vm207, %v210, %v213
    %v215 = vsel %vm205, nan, %v214
    %v216 = vand.u32 2147483647, %v98
    %vm217 = vcmp.le.f32.partialorder %v216, 0.7853982
    %vm218 = vcmp.lt.s32.totalorder %v98, 0
    %v219 = vand.u32 %v98, 2139095040
    %v220 = vshrl.u32 %v219, 23
    %v221 = vsub.s32 %v220, 127
    %v222 = vand.u32 2147483647, %v98
    %v223 = vand.u32 %v222, 8388607
    %v224 = vor.u32 %v223, 8388608
    %v225 = vsub.s32 0, %v224
    %v226 = vadd.s32 %v221, 1
    %vm227 = vcmp.gt.s32.totalorder %v226, 0
    %v228 = vsel %vm227, %v226, 0
    %v229 = vshrl.u32 %v228, 5
    %v230 = vand.u32 %v228, 31
    %v231 = vsub.s32 32, %v230
    %v232 = vshrl.u32 683565275, %v231
    %v233 = vshll.u32 683565275, %v230
    %v234 = vshrl.u32 2475754826, %v231
    %v235 = vor.u32 %v233, %v234
    %v236 = vshll.u32 2475754826, %v230
    %v237 = vshrl.u32 2131351028, %v231
    %v238 = vor.u32 %v236, %v237
    %v239 = vshll.u32 2131351028, %v230
    %v240 = vshrl.u32 2102212464, %v231
    %v241 = vor.u32 %v239, %v240
    %v242 = vshll.u32 2102212464, %v230
    %v243 = vshrl.u32 920167782, %v231
    %v244 = vor.u32 %v242, %v243
    %v245 = vshll.u32 920167782, %v230
    %v246 = vshrl.u32 1326507024, %v231
    %v247 = vor.u32 %v245, %v246
    %vm248 = vcmp.lt.s32.totalorder %v229, 1
    %vm249 = vcmp.lt.s32.totalorder %v229, 2
    %vm250 = vcmp.lt.s32.totalorder %v229, 3
    %vm251 = vcmp.lt.s32.totalorder %v229, 4
    %v252 = vsel %vm248, %v232, %v235
    %v253 = vsel %vm251, %v241, 2102212464
    %v254 = vsel %vm250, %v238, %v253
    %v255 = vsel %vm249, %v252, %v254
    %v256 = vsel %vm248, %v235, %v238
    %v257 = vsel %vm251, %v244, 920167782
    %v258 = vsel %vm250, %v241, %v257
    %v259 = vsel %vm249, %v256, %v258
    %v260 = vsel %vm248, %v238, %v241
    %v261 = vsel %vm251, %v247, 1326507024
    %v262 = vsel %vm250, %v244, %v261
    %v263 = vsel %vm249, %v260, %v262
    %v264 = vshll.u32 %v224, 8
    %v265 = vmul.u32.u64.compose %v264, %v263
    %v266 = vextract.low.u32 %v265
    %v267 = vextract.high.u32 %v265
    %v268 = vmul.u32.u64.compose %v264, %v259
    %v269 = vextract.low.u32 %v268
    %v270 = vextract.high.u32 %v268
    %v271 = vmul.u32 %v264, %v255
    %v272 = vadd.s32 %v267, %v269
    %vm273 = vc.u32 %v267, %v269
    %v274 = vadd.s32 %v270, 1
    %v275 = vsel %vm273, %v274, %v270
    %v276 = vadd.s32 %v271, %v275
    %v277 = vadd.s32 %v276, 536870912
    %v278 = vshrl.u32 %v277, 30
    %v279 = vshll.u32 %v278, 30
    %v280 = vsub.s32 %v276, %v279
    %vm281 = vcmp.lt.s32.totalorder %v280, 0
    %v282 = vsub.s32 0, %v280
    %v283 = vsel %vm281, %v282, %v280
    %v284 = vclz %v283
    %v285 = vsub.s32 %v284, 2
    %vm286 = vcmp.gt.s32.totalorder 0, %v285
    %v287 = vsel %vm286, 0, %v285
    %v288 = vsub.s32 32, %v287
    %v289 = vshll.u32 %v280, %v287
    %v290 = vshrl.u32 %v272, %v288
    %v291 = vor.u32 %v289, %v290
    %v292 = vsub.s32 4294967266, %v287
    %v293 = vadd.s32 %v292, 127
    %v294 = vshll.u32 %v293, 23
    %v295 = vor.u32 4788187, %v294
    %v296 = vand.u32 2147483647, %v295
    %v298 = vcvt.s32.f32 %v291
    %v299 = vmul.f32 %v298, %v296
    %v300 = vxor.u32 %v299, 2147483648
    %v301 = vsel %vm218, %v300, %v299
    %v302 = vsub.s32 4, %v278
    %v303 = vsel %vm218, %v302, %v278
    %v304 = vsel %vm217, %v98, %v301
    %v305 = vsel %vm217, 0, %v303
    %v306 = vcosq.f32.pop %v304
    %v307 = vsinq.f32.pop %v304
    %vm308 = vweird.f32 %v98
    %v309 = vand.u32 %v305, 3
    %vm310 = vcmp.lt.s32.totalorder %v309, 2
    %vm311 = vcmp.eq.s32.totalorder %v309, 0
    %v312 = vxor.u32 %v307, 2147483648
    %v313 = vsel %vm311, %v306, %v312
    %vm314 = vcmp.eq.s32.totalorder %v309, 2
    %v315 = vxor.u32 %v306, 2147483648
    %v316 = vsel %vm314, %v315, %v307
    %v317 = vsel %vm310, %v313, %v316
    %v318 = vsel %vm308, nan, %v317
    %v319 = vand.u32 2147483647, %v99
    %vm320 = vcmp.le.f32.partialorder %v319, 0.7853982
    %vm321 = vcmp.lt.s32.totalorder %v99, 0
    %v322 = vand.u32 %v99, 2139095040
    %v323 = vshrl.u32 %v322, 23
    %v324 = vsub.s32 %v323, 127
    %v325 = vand.u32 2147483647, %v99
    %v326 = vand.u32 %v325, 8388607
    %v327 = vor.u32 %v326, 8388608
    %v328 = vsub.s32 0, %v327
    %v329 = vadd.s32 %v324, 1
    %vm330 = vcmp.gt.s32.totalorder %v329, 0
    %v331 = vsel %vm330, %v329, 0
    %v332 = vshrl.u32 %v331, 5
    %v333 = vand.u32 %v331, 31
    %v334 = vsub.s32 32, %v333
    %v335 = vshrl.u32 683565275, %v334
    %v336 = vshll.u32 683565275, %v333
    %v337 = vshrl.u32 2475754826, %v334
    %v338 = vor.u32 %v336, %v337
    %v339 = vshll.u32 2475754826, %v333
    %v340 = vshrl.u32 2131351028, %v334
    %v341 = vor.u32 %v339, %v340
    %v342 = vshll.u32 2131351028, %v333
    %v343 = vshrl.u32 2102212464, %v334
    %v344 = vor.u32 %v342, %v343
    %v345 = vshll.u32 2102212464, %v333
    %v346 = vshrl.u32 920167782, %v334
    %v347 = vor.u32 %v345, %v346
    %v348 = vshll.u32 920167782, %v333
    %v349 = vshrl.u32 1326507024, %v334
    %v350 = vor.u32 %v348, %v349
    %vm351 = vcmp.lt.s32.totalorder %v332, 1
    %vm352 = vcmp.lt.s32.totalorder %v332, 2
    %vm353 = vcmp.lt.s32.totalorder %v332, 3
    %vm354 = vcmp.lt.s32.totalorder %v332, 4
    %v355 = vsel %vm351, %v335, %v338
    %v356 = vsel %vm354, %v344, 2102212464
    %v357 = vsel %vm353, %v341, %v356
    %v358 = vsel %vm352, %v355, %v357
    %v359 = vsel %vm351, %v338, %v341
    %v360 = vsel %vm354, %v347, 920167782
    %v361 = vsel %vm353, %v344, %v360
    %v362 = vsel %vm352, %v359, %v361
    %v363 = vsel %vm351, %v341, %v344
    %v364 = vsel %vm354, %v350, 1326507024
    %v365 = vsel %vm353, %v347, %v364
    %v366 = vsel %vm352, %v363, %v365
    %v367 = vshll.u32 %v327, 8
    %v368 = vmul.u32.u64.compose %v367, %v366
    %v369 = vextract.low.u32 %v368
    %v370 = vextract.high.u32 %v368
    %v371 = vmul.u32.u64.compose %v367, %v362
    %v372 = vextract.low.u32 %v371
    %v373 = vextract.high.u32 %v371
    %v374 = vmul.u32 %v367, %v358
    %v375 = vadd.s32 %v370, %v372
    %vm376 = vc.u32 %v370, %v372
    %v377 = vadd.s32 %v373, 1
    %v378 = vsel %vm376, %v377, %v373
    %v379 = vadd.s32 %v374, %v378
    %v380 = vadd.s32 %v379, 536870912
    %v381 = vshrl.u32 %v380, 30
    %v382 = vshll.u32 %v381, 30
    %v383 = vsub.s32 %v379, %v382
    %vm384 = vcmp.lt.s32.totalorder %v383, 0
    %v385 = vsub.s32 0, %v383
    %v386 = vsel %vm384, %v385, %v383
    %v387 = vclz %v386
    %v388 = vsub.s32 %v387, 2
    %vm389 = vcmp.gt.s32.totalorder 0, %v388
    %v390 = vsel %vm389, 0, %v388
    %v391 = vsub.s32 32, %v390
    %v392 = vshll.u32 %v383, %v390
    %v393 = vshrl.u32 %v375, %v391
    %v394 = vor.u32 %v392, %v393
    %v395 = vsub.s32 4294967266, %v390
    %v396 = vadd.s32 %v395, 127
    %v397 = vshll.u32 %v396, 23
    %v398 = vor.u32 4788187, %v397
    %v399 = vand.u32 2147483647, %v398
    %v401 = vcvt.s32.f32 %v394
    %v402 = vmul.f32 %v401, %v399
    %v403 = vxor.u32 %v402, 2147483648
    %v404 = vsel %vm321, %v403, %v402
    %v405 = vsub.s32 4, %v381
    %v406 = vsel %vm321, %v405, %v381
    %v407 = vsel %vm320, %v99, %v404
    %v408 = vsel %vm320, 0, %v406
    %v409 = vcosq.f32.pop %v407
    %v410 = vsinq.f32.pop %v407
    %vm411 = vweird.f32 %v99
    %v412 = vand.u32 %v408, 3
    %vm413 = vcmp.lt.s32.totalorder %v412, 2
    %vm414 = vcmp.eq.s32.totalorder %v412, 0
    %v415 = vxor.u32 %v410, 2147483648
    %v416 = vsel %vm414, %v409, %v415
    %vm417 = vcmp.eq.s32.totalorder %v412, 2
    %v418 = vxor.u32 %v409, 2147483648
    %v419 = vsel %vm417, %v418, %v410
    %v420 = vsel %vm413, %v416, %v419
    %v421 = vsel %vm411, nan, %v420
    %v422 = vand.u32 2147483647, %v100
    %vm423 = vcmp.le.f32.partialorder %v422, 0.7853982
    %vm424 = vcmp.lt.s32.totalorder %v100, 0
    %v425 = vand.u32 %v100, 2139095040
    %v426 = vshrl.u32 %v425, 23
    %v427 = vsub.s32 %v426, 127
    %v428 = vand.u32 2147483647, %v100
    %v429 = vand.u32 %v428, 8388607
    %v430 = vor.u32 %v429, 8388608
    %v431 = vsub.s32 0, %v430
    %v432 = vadd.s32 %v427, 1
    %vm433 = vcmp.gt.s32.totalorder %v432, 0
    %v434 = vsel %vm433, %v432, 0
    %v435 = vshrl.u32 %v434, 5
    %v436 = vand.u32 %v434, 31
    %v437 = vsub.s32 32, %v436
    %v438 = vshrl.u32 683565275, %v437
    %v439 = vshll.u32 683565275, %v436
    %v440 = vshrl.u32 2475754826, %v437
    %v441 = vor.u32 %v439, %v440
    %v442 = vshll.u32 2475754826, %v436
    %v443 = vshrl.u32 2131351028, %v437
    %v444 = vor.u32 %v442, %v443
    %v445 = vshll.u32 2131351028, %v436
    %v446 = vshrl.u32 2102212464, %v437
    %v447 = vor.u32 %v445, %v446
    %v448 = vshll.u32 2102212464, %v436
    %v449 = vshrl.u32 920167782, %v437
    %v450 = vor.u32 %v448, %v449
    %v451 = vshll.u32 920167782, %v436
    %v452 = vshrl.u32 1326507024, %v437
    %v453 = vor.u32 %v451, %v452
    %vm454 = vcmp.lt.s32.totalorder %v435, 1
    %vm455 = vcmp.lt.s32.totalorder %v435, 2
    %vm456 = vcmp.lt.s32.totalorder %v435, 3
    %vm457 = vcmp.lt.s32.totalorder %v435, 4
    %v458 = vsel %vm454, %v438, %v441
    %v459 = vsel %vm457, %v447, 2102212464
    %v460 = vsel %vm456, %v444, %v459
    %v461 = vsel %vm455, %v458, %v460
    %v462 = vsel %vm454, %v441, %v444
    %v463 = vsel %vm457, %v450, 920167782
    %v464 = vsel %vm456, %v447, %v463
    %v465 = vsel %vm455, %v462, %v464
    %v466 = vsel %vm454, %v444, %v447
    %v467 = vsel %vm457, %v453, 1326507024
    %v468 = vsel %vm456, %v450, %v467
    %v469 = vsel %vm455, %v466, %v468
    %v470 = vshll.u32 %v430, 8
    %v471 = vmul.u32.u64.compose %v470, %v469
    %v472 = vextract.low.u32 %v471
    %v473 = vextract.high.u32 %v471
    %v474 = vmul.u32.u64.compose %v470, %v465
    %v475 = vextract.low.u32 %v474
    %v476 = vextract.high.u32 %v474
    %v477 = vmul.u32 %v470, %v461
    %v478 = vadd.s32 %v473, %v475
    %vm479 = vc.u32 %v473, %v475
    %v480 = vadd.s32 %v476, 1
    %v481 = vsel %vm479, %v480, %v476
    %v482 = vadd.s32 %v477, %v481
    %v483 = vadd.s32 %v482, 536870912
    %v484 = vshrl.u32 %v483, 30
    %v485 = vshll.u32 %v484, 30
    %v486 = vsub.s32 %v482, %v485
    %vm487 = vcmp.lt.s32.totalorder %v486, 0
    %v488 = vsub.s32 0, %v486
    %v489 = vsel %vm487, %v488, %v486
    %v490 = vclz %v489
    %v491 = vsub.s32 %v490, 2
    %vm492 = vcmp.gt.s32.totalorder 0, %v491
    %v493 = vsel %vm492, 0, %v491
    %v494 = vsub.s32 32, %v493
    %v495 = vshll.u32 %v486, %v493
    %v496 = vshrl.u32 %v478, %v494
    %v497 = vor.u32 %v495, %v496
    %v498 = vsub.s32 4294967266, %v493
    %v499 = vadd.s32 %v498, 127
    %v500 = vshll.u32 %v499, 23
    %v501 = vor.u32 4788187, %v500
    %v502 = vand.u32 2147483647, %v501
    %v504 = vcvt.s32.f32 %v497
    %v505 = vmul.f32 %v504, %v502
    %v506 = vxor.u32 %v505, 2147483648
    %v507 = vsel %vm424, %v506, %v505
    %v508 = vsub.s32 4, %v484
    %v509 = vsel %vm424, %v508, %v484
    %v510 = vsel %vm423, %v100, %v507
    %v511 = vsel %vm423, 0, %v509
    %v512 = vcosq.f32.pop %v510
    %v513 = vsinq.f32.pop %v510
    %vm514 = vweird.f32 %v100
    %v515 = vand.u32 %v511, 3
    %vm516 = vcmp.lt.s32.totalorder %v515, 2
    %vm517 = vcmp.eq.s32.totalorder %v515, 0
    %v518 = vxor.u32 %v513, 2147483648
    %v519 = vsel %vm517, %v512, %v518
    %vm520 = vcmp.eq.s32.totalorder %v515, 2
    %v521 = vxor.u32 %v512, 2147483648
    %v522 = vsel %vm520, %v521, %v513
    %v523 = vsel %vm516, %v519, %v522
    %v524 = vsel %vm514, nan, %v523
    %v525 = vand.u32 2147483647, %v101
    %vm526 = vcmp.le.f32.partialorder %v525, 0.7853982
    %vm527 = vcmp.lt.s32.totalorder %v101, 0
    %v528 = vand.u32 %v101, 2139095040
    %v529 = vshrl.u32 %v528, 23
    %v530 = vsub.s32 %v529, 127
    %v531 = vand.u32 2147483647, %v101
    %v532 = vand.u32 %v531, 8388607
    %v533 = vor.u32 %v532, 8388608
    %v534 = vsub.s32 0, %v533
    %v535 = vadd.s32 %v530, 1
    %vm536 = vcmp.gt.s32.totalorder %v535, 0
    %v537 = vsel %vm536, %v535, 0
    %v538 = vshrl.u32 %v537, 5
    %v539 = vand.u32 %v537, 31
    %v540 = vsub.s32 32, %v539
    %v541 = vshrl.u32 683565275, %v540
    %v542 = vshll.u32 683565275, %v539
    %v543 = vshrl.u32 2475754826, %v540
    %v544 = vor.u32 %v542, %v543
    %v545 = vshll.u32 2475754826, %v539
    %v546 = vshrl.u32 2131351028, %v540
    %v547 = vor.u32 %v545, %v546
    %v548 = vshll.u32 2131351028, %v539
    %v549 = vshrl.u32 2102212464, %v540
    %v550 = vor.u32 %v548, %v549
    %v551 = vshll.u32 2102212464, %v539
    %v552 = vshrl.u32 920167782, %v540
    %v553 = vor.u32 %v551, %v552
    %v554 = vshll.u32 920167782, %v539
    %v555 = vshrl.u32 1326507024, %v540
    %v556 = vor.u32 %v554, %v555
    %vm557 = vcmp.lt.s32.totalorder %v538, 1
    %vm558 = vcmp.lt.s32.totalorder %v538, 2
    %vm559 = vcmp.lt.s32.totalorder %v538, 3
    %vm560 = vcmp.lt.s32.totalorder %v538, 4
    %v561 = vsel %vm557, %v541, %v544
    %v562 = vsel %vm560, %v550, 2102212464
    %v563 = vsel %vm559, %v547, %v562
    %v564 = vsel %vm558, %v561, %v563
    %v565 = vsel %vm557, %v544, %v547
    %v566 = vsel %vm560, %v553, 920167782
    %v567 = vsel %vm559, %v550, %v566
    %v568 = vsel %vm558, %v565, %v567
    %v569 = vsel %vm557, %v547, %v550
    %v570 = vsel %vm560, %v556, 1326507024
    %v571 = vsel %vm559, %v553, %v570
    %v572 = vsel %vm558, %v569, %v571
    %v573 = vshll.u32 %v533, 8
    %v574 = vmul.u32.u64.compose %v573, %v572
    %v575 = vextract.low.u32 %v574
    %v576 = vextract.high.u32 %v574
    %v577 = vmul.u32.u64.compose %v573, %v568
    %v578 = vextract.low.u32 %v577
    %v579 = vextract.high.u32 %v577
    %v580 = vmul.u32 %v573, %v564
    %v581 = vadd.s32 %v576, %v578
    %vm582 = vc.u32 %v576, %v578
    %v583 = vadd.s32 %v579, 1
    %v584 = vsel %vm582, %v583, %v579
    %v585 = vadd.s32 %v580, %v584
    %v586 = vadd.s32 %v585, 536870912
    %v587 = vshrl.u32 %v586, 30
    %v588 = vshll.u32 %v587, 30
    %v589 = vsub.s32 %v585, %v588
    %vm590 = vcmp.lt.s32.totalorder %v589, 0
    %v591 = vsub.s32 0, %v589
    %v592 = vsel %vm590, %v591, %v589
    %v593 = vclz %v592
    %v594 = vsub.s32 %v593, 2
    %vm595 = vcmp.gt.s32.totalorder 0, %v594
    %v596 = vsel %vm595, 0, %v594
    %v597 = vsub.s32 32, %v596
    %v598 = vshll.u32 %v589, %v596
    %v599 = vshrl.u32 %v581, %v597
    %v600 = vor.u32 %v598, %v599
    %v601 = vsub.s32 4294967266, %v596
    %v602 = vadd.s32 %v601, 127
    %v603 = vshll.u32 %v602, 23
    %v604 = vor.u32 4788187, %v603
    %v605 = vand.u32 2147483647, %v604
    %v607 = vcvt.s32.f32 %v600
    %v608 = vmul.f32 %v607, %v605
    %v609 = vxor.u32 %v608, 2147483648
    %v610 = vsel %vm527, %v609, %v608
    %v611 = vsub.s32 4, %v587
    %v612 = vsel %vm527, %v611, %v587
    %v613 = vsel %vm526, %v101, %v610
    %v614 = vsel %vm526, 0, %v612
    %v615 = vcosq.f32.pop %v613
    %v616 = vsinq.f32.pop %v613
    %vm617 = vweird.f32 %v101
    %v618 = vand.u32 %v614, 3
    %vm619 = vcmp.lt.s32.totalorder %v618, 2
    %vm620 = vcmp.eq.s32.totalorder %v618, 0
    %v621 = vxor.u32 %v616, 2147483648
    %v622 = vsel %vm620, %v615, %v621
    %vm623 = vcmp.eq.s32.totalorder %v618, 2
    %v624 = vxor.u32 %v615, 2147483648
    %v625 = vsel %vm623, %v624, %v616
    %v626 = vsel %vm619, %v622, %v625
    %v627 = vsel %vm617, nan, %v626
    %v628 = vand.u32 2147483647, %v102
    %vm629 = vcmp.le.f32.partialorder %v628, 0.7853982
    %vm630 = vcmp.lt.s32.totalorder %v102, 0
    %v631 = vand.u32 %v102, 2139095040
    %v632 = vshrl.u32 %v631, 23
    %v633 = vsub.s32 %v632, 127
    %v634 = vand.u32 2147483647, %v102
    %v635 = vand.u32 %v634, 8388607
    %v636 = vor.u32 %v635, 8388608
    %v637 = vsub.s32 0, %v636
    %v638 = vadd.s32 %v633, 1
    %vm639 = vcmp.gt.s32.totalorder %v638, 0
    %v640 = vsel %vm639, %v638, 0
    %v641 = vshrl.u32 %v640, 5
    %v642 = vand.u32 %v640, 31
    %v643 = vsub.s32 32, %v642
    %v644 = vshrl.u32 683565275, %v643
    %v645 = vshll.u32 683565275, %v642
    %v646 = vshrl.u32 2475754826, %v643
    %v647 = vor.u32 %v645, %v646
    %v648 = vshll.u32 2475754826, %v642
    %v649 = vshrl.u32 2131351028, %v643
    %v650 = vor.u32 %v648, %v649
    %v651 = vshll.u32 2131351028, %v642
    %v652 = vshrl.u32 2102212464, %v643
    %v653 = vor.u32 %v651, %v652
    %v654 = vshll.u32 2102212464, %v642
    %v655 = vshrl.u32 920167782, %v643
    %v656 = vor.u32 %v654, %v655
    %v657 = vshll.u32 920167782, %v642
    %v658 = vshrl.u32 1326507024, %v643
    %v659 = vor.u32 %v657, %v658
    %vm660 = vcmp.lt.s32.totalorder %v641, 1
    %vm661 = vcmp.lt.s32.totalorder %v641, 2
    %vm662 = vcmp.lt.s32.totalorder %v641, 3
    %vm663 = vcmp.lt.s32.totalorder %v641, 4
    %v664 = vsel %vm660, %v644, %v647
    %v665 = vsel %vm663, %v653, 2102212464
    %v666 = vsel %vm662, %v650, %v665
    %v667 = vsel %vm661, %v664, %v666
    %v668 = vsel %vm660, %v647, %v650
    %v669 = vsel %vm663, %v656, 920167782
    %v670 = vsel %vm662, %v653, %v669
    %v671 = vsel %vm661, %v668, %v670
    %v672 = vsel %vm660, %v650, %v653
    %v673 = vsel %vm663, %v659, 1326507024
    %v674 = vsel %vm662, %v656, %v673
    %v675 = vsel %vm661, %v672, %v674
    %v676 = vshll.u32 %v636, 8
    %v677 = vmul.u32.u64.compose %v676, %v675
    %v678 = vextract.low.u32 %v677
    %v679 = vextract.high.u32 %v677
    %v680 = vmul.u32.u64.compose %v676, %v671
    %v681 = vextract.low.u32 %v680
    %v682 = vextract.high.u32 %v680
    %v683 = vmul.u32 %v676, %v667
    %v684 = vadd.s32 %v679, %v681
    %vm685 = vc.u32 %v679, %v681
    %v686 = vadd.s32 %v682, 1
    %v687 = vsel %vm685, %v686, %v682
    %v688 = vadd.s32 %v683, %v687
    %v689 = vadd.s32 %v688, 536870912
    %v690 = vshrl.u32 %v689, 30
    %v691 = vshll.u32 %v690, 30
    %v692 = vsub.s32 %v688, %v691
    %vm693 = vcmp.lt.s32.totalorder %v692, 0
    %v694 = vsub.s32 0, %v692
    %v695 = vsel %vm693, %v694, %v692
    %v696 = vclz %v695
    %v697 = vsub.s32 %v696, 2
    %vm698 = vcmp.gt.s32.totalorder 0, %v697
    %v699 = vsel %vm698, 0, %v697
    %v700 = vsub.s32 32, %v699
    %v701 = vshll.u32 %v692, %v699
    %v702 = vshrl.u32 %v684, %v700
    %v703 = vor.u32 %v701, %v702
    %v704 = vsub.s32 4294967266, %v699
    %v705 = vadd.s32 %v704, 127
    %v706 = vshll.u32 %v705, 23
    %v707 = vor.u32 4788187, %v706
    %v708 = vand.u32 2147483647, %v707
    %v710 = vcvt.s32.f32 %v703
    %v711 = vmul.f32 %v710, %v708
    %v712 = vxor.u32 %v711, 2147483648
    %v713 = vsel %vm630, %v712, %v711
    %v714 = vsub.s32 4, %v690
    %v715 = vsel %vm630, %v714, %v690
    %v716 = vsel %vm629, %v102, %v713
    %v717 = vsel %vm629, 0, %v715
    %v718 = vcosq.f32.pop %v716
    %v719 = vsinq.f32.pop %v716
    %vm720 = vweird.f32 %v102
    %v721 = vand.u32 %v717, 3
    %vm722 = vcmp.lt.s32.totalorder %v721, 2
    %vm723 = vcmp.eq.s32.totalorder %v721, 0
    %v724 = vxor.u32 %v719, 2147483648
    %v725 = vsel %vm723, %v718, %v724
    %vm726 = vcmp.eq.s32.totalorder %v721, 2
    %v727 = vxor.u32 %v718, 2147483648
    %v728 = vsel %vm726, %v727, %v719
    %v729 = vsel %vm722, %v725, %v728
    %v730 = vsel %vm720, nan, %v729
    %v731 = vand.u32 2147483647, %v103
    %vm732 = vcmp.le.f32.partialorder %v731, 0.7853982
    %vm733 = vcmp.lt.s32.totalorder %v103, 0
    %v734 = vand.u32 %v103, 2139095040
    %v735 = vshrl.u32 %v734, 23
    %v736 = vsub.s32 %v735, 127
    %v737 = vand.u32 2147483647, %v103
    %v738 = vand.u32 %v737, 8388607
    %v739 = vor.u32 %v738, 8388608
    %v740 = vsub.s32 0, %v739
    %v741 = vadd.s32 %v736, 1
    %vm742 = vcmp.gt.s32.totalorder %v741, 0
    %v743 = vsel %vm742, %v741, 0
    %v744 = vshrl.u32 %v743, 5
    %v745 = vand.u32 %v743, 31
    %v746 = vsub.s32 32, %v745
    %v747 = vshrl.u32 683565275, %v746
    %v748 = vshll.u32 683565275, %v745
    %v749 = vshrl.u32 2475754826, %v746
    %v750 = vor.u32 %v748, %v749
    %v751 = vshll.u32 2475754826, %v745
    %v752 = vshrl.u32 2131351028, %v746
    %v753 = vor.u32 %v751, %v752
    %v754 = vshll.u32 2131351028, %v745
    %v755 = vshrl.u32 2102212464, %v746
    %v756 = vor.u32 %v754, %v755
    %v757 = vshll.u32 2102212464, %v745
    %v758 = vshrl.u32 920167782, %v746
    %v759 = vor.u32 %v757, %v758
    %v760 = vshll.u32 920167782, %v745
    %v761 = vshrl.u32 1326507024, %v746
    %v762 = vor.u32 %v760, %v761
    %vm763 = vcmp.lt.s32.totalorder %v744, 1
    %vm764 = vcmp.lt.s32.totalorder %v744, 2
    %vm765 = vcmp.lt.s32.totalorder %v744, 3
    %vm766 = vcmp.lt.s32.totalorder %v744, 4
    %v767 = vsel %vm763, %v747, %v750
    %v768 = vsel %vm766, %v756, 2102212464
    %v769 = vsel %vm765, %v753, %v768
    %v770 = vsel %vm764, %v767, %v769
    %v771 = vsel %vm763, %v750, %v753
    %v772 = vsel %vm766, %v759, 920167782
    %v773 = vsel %vm765, %v756, %v772
    %v774 = vsel %vm764, %v771, %v773
    %v775 = vsel %vm763, %v753, %v756
    %v776 = vsel %vm766, %v762, 1326507024
    %v777 = vsel %vm765, %v759, %v776
    %v778 = vsel %vm764, %v775, %v777
    %v779 = vshll.u32 %v739, 8
    %v780 = vmul.u32.u64.compose %v779, %v778
    %v781 = vextract.low.u32 %v780
    %v782 = vextract.high.u32 %v780
    %v783 = vmul.u32.u64.compose %v779, %v774
    %v784 = vextract.low.u32 %v783
    %v785 = vextract.high.u32 %v783
    %v786 = vmul.u32 %v779, %v770
    %v787 = vadd.s32 %v782, %v784
    %vm788 = vc.u32 %v782, %v784
    %v789 = vadd.s32 %v785, 1
    %v790 = vsel %vm788, %v789, %v785
    %v791 = vadd.s32 %v786, %v790
    %v792 = vadd.s32 %v791, 536870912
    %v793 = vshrl.u32 %v792, 30
    %v794 = vshll.u32 %v793, 30
    %v795 = vsub.s32 %v791, %v794
    %vm796 = vcmp.lt.s32.totalorder %v795, 0
    %v797 = vsub.s32 0, %v795
    %v798 = vsel %vm796, %v797, %v795
    %v799 = vclz %v798
    %v800 = vsub.s32 %v799, 2
    %vm801 = vcmp.gt.s32.totalorder 0, %v800
    %v802 = vsel %vm801, 0, %v800
    %v803 = vsub.s32 32, %v802
    %v804 = vshll.u32 %v795, %v802
    %v805 = vshrl.u32 %v787, %v803
    %v806 = vor.u32 %v804, %v805
    %v807 = vsub.s32 4294967266, %v802
    %v808 = vadd.s32 %v807, 127
    %v809 = vshll.u32 %v808, 23
    %v810 = vor.u32 4788187, %v809
    %v811 = vand.u32 2147483647, %v810
    %v813 = vcvt.s32.f32 %v806
    %v814 = vmul.f32 %v813, %v811
    %v815 = vxor.u32 %v814, 2147483648
    %v816 = vsel %vm733, %v815, %v814
    %v817 = vsub.s32 4, %v793
    %v818 = vsel %vm733, %v817, %v793
    %v819 = vsel %vm732, %v103, %v816
    %v820 = vsel %vm732, 0, %v818
    %v821 = vcosq.f32.pop %v819
    %v822 = vsinq.f32.pop %v819
    %vm823 = vweird.f32 %v103
    %v824 = vand.u32 %v820, 3
    %vm825 = vcmp.lt.s32.totalorder %v824, 2
    %vm826 = vcmp.eq.s32.totalorder %v824, 0
    %v827 = vxor.u32 %v822, 2147483648
    %v828 = vsel %vm826, %v821, %v827
    %vm829 = vcmp.eq.s32.totalorder %v824, 2
    %v830 = vxor.u32 %v821, 2147483648
    %v831 = vsel %vm829, %v830, %v822
    %v832 = vsel %vm825, %v828, %v831
    %v833 = vsel %vm823, nan, %v832
    %v834 = vand.u32 2147483647, %v104
    %vm835 = vcmp.le.f32.partialorder %v834, 0.7853982
    %vm836 = vcmp.lt.s32.totalorder %v104, 0
    %v837 = vand.u32 %v104, 2139095040
    %v838 = vshrl.u32 %v837, 23
    %v839 = vsub.s32 %v838, 127
    %v840 = vand.u32 2147483647, %v104
    %v841 = vand.u32 %v840, 8388607
    %v842 = vor.u32 %v841, 8388608
    %v843 = vsub.s32 0, %v842
    %v844 = vadd.s32 %v839, 1
    %vm845 = vcmp.gt.s32.totalorder %v844, 0
    %v846 = vsel %vm845, %v844, 0
    %v847 = vshrl.u32 %v846, 5
    %v848 = vand.u32 %v846, 31
    %v849 = vsub.s32 32, %v848
    %v850 = vshrl.u32 683565275, %v849
    %v851 = vshll.u32 683565275, %v848
    %v852 = vshrl.u32 2475754826, %v849
    %v853 = vor.u32 %v851, %v852
    %v854 = vshll.u32 2475754826, %v848
    %v855 = vshrl.u32 2131351028, %v849
    %v856 = vor.u32 %v854, %v855
    %v857 = vshll.u32 2131351028, %v848
    %v858 = vshrl.u32 2102212464, %v849
    %v859 = vor.u32 %v857, %v858
    %v860 = vshll.u32 2102212464, %v848
    %v861 = vshrl.u32 920167782, %v849
    %v862 = vor.u32 %v860, %v861
    %v863 = vshll.u32 920167782, %v848
    %v864 = vshrl.u32 1326507024, %v849
    %v865 = vor.u32 %v863, %v864
    %vm866 = vcmp.lt.s32.totalorder %v847, 1
    %vm867 = vcmp.lt.s32.totalorder %v847, 2
    %vm868 = vcmp.lt.s32.totalorder %v847, 3
    %vm869 = vcmp.lt.s32.totalorder %v847, 4
    %v870 = vsel %vm866, %v850, %v853
    %v871 = vsel %vm869, %v859, 2102212464
    %v872 = vsel %vm868, %v856, %v871
    %v873 = vsel %vm867, %v870, %v872
    %v874 = vsel %vm866, %v853, %v856
    %v875 = vsel %vm869, %v862, 920167782
    %v876 = vsel %vm868, %v859, %v875
    %v877 = vsel %vm867, %v874, %v876
    %v878 = vsel %vm866, %v856, %v859
    %v879 = vsel %vm869, %v865, 1326507024
    %v880 = vsel %vm868, %v862, %v879
    %v881 = vsel %vm867, %v878, %v880
    %v882 = vshll.u32 %v842, 8
    %v883 = vmul.u32.u64.compose %v882, %v881
    %v884 = vextract.low.u32 %v883
    %v885 = vextract.high.u32 %v883
    %v886 = vmul.u32.u64.compose %v882, %v877
    %v887 = vextract.low.u32 %v886
    %v888 = vextract.high.u32 %v886
    %v889 = vmul.u32 %v882, %v873
    %v890 = vadd.s32 %v885, %v887
    %vm891 = vc.u32 %v885, %v887
    %v892 = vadd.s32 %v888, 1
    %v893 = vsel %vm891, %v892, %v888
    %v894 = vadd.s32 %v889, %v893
    %v895 = vadd.s32 %v894, 536870912
    %v896 = vshrl.u32 %v895, 30
    %v897 = vshll.u32 %v896, 30
    %v898 = vsub.s32 %v894, %v897
    %vm899 = vcmp.lt.s32.totalorder %v898, 0
    %v900 = vsub.s32 0, %v898
    %v901 = vsel %vm899, %v900, %v898
    %v902 = vclz %v901
    %v903 = vsub.s32 %v902, 2
    %vm904 = vcmp.gt.s32.totalorder 0, %v903
    %v905 = vsel %vm904, 0, %v903
    %v906 = vsub.s32 32, %v905
    %v907 = vshll.u32 %v898, %v905
    %v908 = vshrl.u32 %v890, %v906
    %v909 = vor.u32 %v907, %v908
    %v910 = vsub.s32 4294967266, %v905
    %v911 = vadd.s32 %v910, 127
    %v912 = vshll.u32 %v911, 23
    %v913 = vor.u32 4788187, %v912
    %v914 = vand.u32 2147483647, %v913
    %v916 = vcvt.s32.f32 %v909
    %v917 = vmul.f32 %v916, %v914
    %v918 = vxor.u32 %v917, 2147483648
    %v919 = vsel %vm836, %v918, %v917
    %v920 = vsub.s32 4, %v896
    %v921 = vsel %vm836, %v920, %v896
    %v922 = vsel %vm835, %v104, %v919
    %v923 = vsel %vm835, 0, %v921
    %v924 = vcosq.f32.pop %v922
    %v925 = vsinq.f32.pop %v922
    %vm926 = vweird.f32 %v104
    %v927 = vand.u32 %v923, 3
    %vm928 = vcmp.lt.s32.totalorder %v927, 2
    %vm929 = vcmp.eq.s32.totalorder %v927, 0
    %v930 = vxor.u32 %v925, 2147483648
    %v931 = vsel %vm929, %v924, %v930
    %vm932 = vcmp.eq.s32.totalorder %v927, 2
    %v933 = vxor.u32 %v924, 2147483648
    %v934 = vsel %vm932, %v933, %v925
    %v935 = vsel %vm928, %v931, %v934
    %v936 = vsel %vm926, nan, %v935
    %v937 = vand.u32 2147483647, %v105
    %vm938 = vcmp.le.f32.partialorder %v937, 0.7853982
    %vm939 = vcmp.lt.s32.totalorder %v105, 0
    %v940 = vand.u32 %v105, 2139095040
    %v941 = vshrl.u32 %v940, 23
    %v942 = vsub.s32 %v941, 127
    %v943 = vand.u32 2147483647, %v105
    %v944 = vand.u32 %v943, 8388607
    %v945 = vor.u32 %v944, 8388608
    %v946 = vsub.s32 0, %v945
    %v947 = vadd.s32 %v942, 1
    %vm948 = vcmp.gt.s32.totalorder %v947, 0
    %v949 = vsel %vm948, %v947, 0
    %v950 = vshrl.u32 %v949, 5
    %v951 = vand.u32 %v949, 31
    %v952 = vsub.s32 32, %v951
    %v953 = vshrl.u32 683565275, %v952
    %v954 = vshll.u32 683565275, %v951
    %v955 = vshrl.u32 2475754826, %v952
    %v956 = vor.u32 %v954, %v955
    %v957 = vshll.u32 2475754826, %v951
    %v958 = vshrl.u32 2131351028, %v952
    %v959 = vor.u32 %v957, %v958
    %v960 = vshll.u32 2131351028, %v951
    %v961 = vshrl.u32 2102212464, %v952
    %v962 = vor.u32 %v960, %v961
    %v963 = vshll.u32 2102212464, %v951
    %v964 = vshrl.u32 920167782, %v952
    %v965 = vor.u32 %v963, %v964
    %v966 = vshll.u32 920167782, %v951
    %v967 = vshrl.u32 1326507024, %v952
    %v968 = vor.u32 %v966, %v967
    %vm969 = vcmp.lt.s32.totalorder %v950, 1
    %vm970 = vcmp.lt.s32.totalorder %v950, 2
    %vm971 = vcmp.lt.s32.totalorder %v950, 3
    %vm972 = vcmp.lt.s32.totalorder %v950, 4
    %v973 = vsel %vm969, %v953, %v956
    %v974 = vsel %vm972, %v962, 2102212464
    %v975 = vsel %vm971, %v959, %v974
    %v976 = vsel %vm970, %v973, %v975
    %v977 = vsel %vm969, %v956, %v959
    %v978 = vsel %vm972, %v965, 920167782
    %v979 = vsel %vm971, %v962, %v978
    %v980 = vsel %vm970, %v977, %v979
    %v981 = vsel %vm969, %v959, %v962
    %v982 = vsel %vm972, %v968, 1326507024
    %v983 = vsel %vm971, %v965, %v982
    %v984 = vsel %vm970, %v981, %v983
    %v985 = vshll.u32 %v945, 8
    %v986 = vmul.u32.u64.compose %v985, %v984
    %v987 = vextract.low.u32 %v986
    %v988 = vextract.high.u32 %v986
    %v989 = vmul.u32.u64.compose %v985, %v980
    %v990 = vextract.low.u32 %v989
    %v991 = vextract.high.u32 %v989
    %v992 = vmul.u32 %v985, %v976
    %v993 = vadd.s32 %v988, %v990
    %vm994 = vc.u32 %v988, %v990
    %v995 = vadd.s32 %v991, 1
    %v996 = vsel %vm994, %v995, %v991
    %v997 = vadd.s32 %v992, %v996
    %v998 = vadd.s32 %v997, 536870912
    %v999 = vshrl.u32 %v998, 30
    %v1000 = vshll.u32 %v999, 30
    %v1001 = vsub.s32 %v997, %v1000
    %vm1002 = vcmp.lt.s32.totalorder %v1001, 0
    %v1003 = vsub.s32 0, %v1001
    %v1004 = vsel %vm1002, %v1003, %v1001
    %v1005 = vclz %v1004
    %v1006 = vsub.s32 %v1005, 2
    %vm1007 = vcmp.gt.s32.totalorder 0, %v1006
    %v1008 = vsel %vm1007, 0, %v1006
    %v1009 = vsub.s32 32, %v1008
    %v1010 = vshll.u32 %v1001, %v1008
    %v1011 = vshrl.u32 %v993, %v1009
    %v1012 = vor.u32 %v1010, %v1011
    %v1013 = vsub.s32 4294967266, %v1008
    %v1014 = vadd.s32 %v1013, 127
    %v1015 = vshll.u32 %v1014, 23
    %v1016 = vor.u32 4788187, %v1015
    %v1017 = vand.u32 2147483647, %v1016
    %v1019 = vcvt.s32.f32 %v1012
    %v1020 = vmul.f32 %v1019, %v1017
    %v1021 = vxor.u32 %v1020, 2147483648
    %v1022 = vsel %vm939, %v1021, %v1020
    %v1023 = vsub.s32 4, %v999
    %v1024 = vsel %vm939, %v1023, %v999
    %v1025 = vsel %vm938, %v105, %v1022
    %v1026 = vsel %vm938, 0, %v1024
    %v1027 = vcosq.f32.pop %v1025
    %v1028 = vsinq.f32.pop %v1025
    %vm1029 = vweird.f32 %v105
    %v1030 = vand.u32 %v1026, 3
    %vm1031 = vcmp.lt.s32.totalorder %v1030, 2
    %vm1032 = vcmp.eq.s32.totalorder %v1030, 0
    %v1033 = vxor.u32 %v1028, 2147483648
    %v1034 = vsel %vm1032, %v1027, %v1033
    %vm1035 = vcmp.eq.s32.totalorder %v1030, 2
    %v1036 = vxor.u32 %v1027, 2147483648
    %v1037 = vsel %vm1035, %v1036, %v1028
    %v1038 = vsel %vm1031, %v1034, %v1037
    %v1039 = vsel %vm1029, nan, %v1038
    %v1040 = vand.u32 2147483647, %v106
    %vm1041 = vcmp.le.f32.partialorder %v1040, 0.7853982
    %vm1042 = vcmp.lt.s32.totalorder %v106, 0
    %v1043 = vand.u32 %v106, 2139095040
    %v1044 = vshrl.u32 %v1043, 23
    %v1045 = vsub.s32 %v1044, 127
    %v1046 = vand.u32 2147483647, %v106
    %v1047 = vand.u32 %v1046, 8388607
    %v1048 = vor.u32 %v1047, 8388608
    %v1049 = vsub.s32 0, %v1048
    %v1050 = vadd.s32 %v1045, 1
    %vm1051 = vcmp.gt.s32.totalorder %v1050, 0
    %v1052 = vsel %vm1051, %v1050, 0
    %v1053 = vshrl.u32 %v1052, 5
    %v1054 = vand.u32 %v1052, 31
    %v1055 = vsub.s32 32, %v1054
    %v1056 = vshrl.u32 683565275, %v1055
    %v1057 = vshll.u32 683565275, %v1054
    %v1058 = vshrl.u32 2475754826, %v1055
    %v1059 = vor.u32 %v1057, %v1058
    %v1060 = vshll.u32 2475754826, %v1054
    %v1061 = vshrl.u32 2131351028, %v1055
    %v1062 = vor.u32 %v1060, %v1061
    %v1063 = vshll.u32 2131351028, %v1054
    %v1064 = vshrl.u32 2102212464, %v1055
    %v1065 = vor.u32 %v1063, %v1064
    %v1066 = vshll.u32 2102212464, %v1054
    %v1067 = vshrl.u32 920167782, %v1055
    %v1068 = vor.u32 %v1066, %v1067
    %v1069 = vshll.u32 920167782, %v1054
    %v1070 = vshrl.u32 1326507024, %v1055
    %v1071 = vor.u32 %v1069, %v1070
    %vm1072 = vcmp.lt.s32.totalorder %v1053, 1
    %vm1073 = vcmp.lt.s32.totalorder %v1053, 2
    %vm1074 = vcmp.lt.s32.totalorder %v1053, 3
    %vm1075 = vcmp.lt.s32.totalorder %v1053, 4
    %v1076 = vsel %vm1072, %v1056, %v1059
    %v1077 = vsel %vm1075, %v1065, 2102212464
    %v1078 = vsel %vm1074, %v1062, %v1077
    %v1079 = vsel %vm1073, %v1076, %v1078
    %v1080 = vsel %vm1072, %v1059, %v1062
    %v1081 = vsel %vm1075, %v1068, 920167782
    %v1082 = vsel %vm1074, %v1065, %v1081
    %v1083 = vsel %vm1073, %v1080, %v1082
    %v1084 = vsel %vm1072, %v1062, %v1065
    %v1085 = vsel %vm1075, %v1071, 1326507024
    %v1086 = vsel %vm1074, %v1068, %v1085
    %v1087 = vsel %vm1073, %v1084, %v1086
    %v1088 = vshll.u32 %v1048, 8
    %v1089 = vmul.u32.u64.compose %v1088, %v1087
    %v1090 = vextract.low.u32 %v1089
    %v1091 = vextract.high.u32 %v1089
    %v1092 = vmul.u32.u64.compose %v1088, %v1083
    %v1093 = vextract.low.u32 %v1092
    %v1094 = vextract.high.u32 %v1092
    %v1095 = vmul.u32 %v1088, %v1079
    %v1096 = vadd.s32 %v1091, %v1093
    %vm1097 = vc.u32 %v1091, %v1093
    %v1098 = vadd.s32 %v1094, 1
    %v1099 = vsel %vm1097, %v1098, %v1094
    %v1100 = vadd.s32 %v1095, %v1099
    %v1101 = vadd.s32 %v1100, 536870912
    %v1102 = vshrl.u32 %v1101, 30
    %v1103 = vshll.u32 %v1102, 30
    %v1104 = vsub.s32 %v1100, %v1103
    %vm1105 = vcmp.lt.s32.totalorder %v1104, 0
    %v1106 = vsub.s32 0, %v1104
    %v1107 = vsel %vm1105, %v1106, %v1104
    %v1108 = vclz %v1107
    %v1109 = vsub.s32 %v1108, 2
    %vm1110 = vcmp.gt.s32.totalorder 0, %v1109
    %v1111 = vsel %vm1110, 0, %v1109
    %v1112 = vsub.s32 32, %v1111
    %v1113 = vshll.u32 %v1104, %v1111
    %v1114 = vshrl.u32 %v1096, %v1112
    %v1115 = vor.u32 %v1113, %v1114
    %v1116 = vsub.s32 4294967266, %v1111
    %v1117 = vadd.s32 %v1116, 127
    %v1118 = vshll.u32 %v1117, 23
    %v1119 = vor.u32 4788187, %v1118
    %v1120 = vand.u32 2147483647, %v1119
    %v1122 = vcvt.s32.f32 %v1115
    %v1123 = vmul.f32 %v1122, %v1120
    %v1124 = vxor.u32 %v1123, 2147483648
    %v1125 = vsel %vm1042, %v1124, %v1123
    %v1126 = vsub.s32 4, %v1102
    %v1127 = vsel %vm1042, %v1126, %v1102
    %v1128 = vsel %vm1041, %v106, %v1125
    %v1129 = vsel %vm1041, 0, %v1127
    %v1130 = vcosq.f32.pop %v1128
    %v1131 = vsinq.f32.pop %v1128
    %vm1132 = vweird.f32 %v106
    %v1133 = vand.u32 %v1129, 3
    %vm1134 = vcmp.lt.s32.totalorder %v1133, 2
    %vm1135 = vcmp.eq.s32.totalorder %v1133, 0
    %v1136 = vxor.u32 %v1131, 2147483648
    %v1137 = vsel %vm1135, %v1130, %v1136
    %vm1138 = vcmp.eq.s32.totalorder %v1133, 2
    %v1139 = vxor.u32 %v1130, 2147483648
    %v1140 = vsel %vm1138, %v1139, %v1131
    %v1141 = vsel %vm1134, %v1137, %v1140
    %v1142 = vsel %vm1132, nan, %v1141
    %v1143 = vand.u32 2147483647, %v107
    %vm1144 = vcmp.le.f32.partialorder %v1143, 0.7853982
    %vm1145 = vcmp.lt.s32.totalorder %v107, 0
    %v1146 = vand.u32 %v107, 2139095040
    %v1147 = vshrl.u32 %v1146, 23
    %v1148 = vsub.s32 %v1147, 127
    %v1149 = vand.u32 2147483647, %v107
    %v1150 = vand.u32 %v1149, 8388607
    %v1151 = vor.u32 %v1150, 8388608
    %v1152 = vsub.s32 0, %v1151
    %v1153 = vadd.s32 %v1148, 1
    %vm1154 = vcmp.gt.s32.totalorder %v1153, 0
    %v1155 = vsel %vm1154, %v1153, 0
    %v1156 = vshrl.u32 %v1155, 5
    %v1157 = vand.u32 %v1155, 31
    %v1158 = vsub.s32 32, %v1157
    %v1159 = vshrl.u32 683565275, %v1158
    %v1160 = vshll.u32 683565275, %v1157
    %v1161 = vshrl.u32 2475754826, %v1158
    %v1162 = vor.u32 %v1160, %v1161
    %v1163 = vshll.u32 2475754826, %v1157
    %v1164 = vshrl.u32 2131351028, %v1158
    %v1165 = vor.u32 %v1163, %v1164
    %v1166 = vshll.u32 2131351028, %v1157
    %v1167 = vshrl.u32 2102212464, %v1158
    %v1168 = vor.u32 %v1166, %v1167
    %v1169 = vshll.u32 2102212464, %v1157
    %v1170 = vshrl.u32 920167782, %v1158
    %v1171 = vor.u32 %v1169, %v1170
    %v1172 = vshll.u32 920167782, %v1157
    %v1173 = vshrl.u32 1326507024, %v1158
    %v1174 = vor.u32 %v1172, %v1173
    %vm1175 = vcmp.lt.s32.totalorder %v1156, 1
    %vm1176 = vcmp.lt.s32.totalorder %v1156, 2
    %vm1177 = vcmp.lt.s32.totalorder %v1156, 3
    %vm1178 = vcmp.lt.s32.totalorder %v1156, 4
    %v1179 = vsel %vm1175, %v1159, %v1162
    %v1180 = vsel %vm1178, %v1168, 2102212464
    %v1181 = vsel %vm1177, %v1165, %v1180
    %v1182 = vsel %vm1176, %v1179, %v1181
    %v1183 = vsel %vm1175, %v1162, %v1165
    %v1184 = vsel %vm1178, %v1171, 920167782
    %v1185 = vsel %vm1177, %v1168, %v1184
    %v1186 = vsel %vm1176, %v1183, %v1185
    %v1187 = vsel %vm1175, %v1165, %v1168
    %v1188 = vsel %vm1178, %v1174, 1326507024
    %v1189 = vsel %vm1177, %v1171, %v1188
    %v1190 = vsel %vm1176, %v1187, %v1189
    %v1191 = vshll.u32 %v1151, 8
    %v1192 = vmul.u32.u64.compose %v1191, %v1190
    %v1193 = vextract.low.u32 %v1192
    %v1194 = vextract.high.u32 %v1192
    %v1195 = vmul.u32.u64.compose %v1191, %v1186
    %v1196 = vextract.low.u32 %v1195
    %v1197 = vextract.high.u32 %v1195
    %v1198 = vmul.u32 %v1191, %v1182
    %v1199 = vadd.s32 %v1194, %v1196
    %vm1200 = vc.u32 %v1194, %v1196
    %v1201 = vadd.s32 %v1197, 1
    %v1202 = vsel %vm1200, %v1201, %v1197
    %v1203 = vadd.s32 %v1198, %v1202
    %v1204 = vadd.s32 %v1203, 536870912
    %v1205 = vshrl.u32 %v1204, 30
    %v1206 = vshll.u32 %v1205, 30
    %v1207 = vsub.s32 %v1203, %v1206
    %vm1208 = vcmp.lt.s32.totalorder %v1207, 0
    %v1209 = vsub.s32 0, %v1207
    %v1210 = vsel %vm1208, %v1209, %v1207
    %v1211 = vclz %v1210
    %v1212 = vsub.s32 %v1211, 2
    %vm1213 = vcmp.gt.s32.totalorder 0, %v1212
    %v1214 = vsel %vm1213, 0, %v1212
    %v1215 = vsub.s32 32, %v1214
    %v1216 = vshll.u32 %v1207, %v1214
    %v1217 = vshrl.u32 %v1199, %v1215
    %v1218 = vor.u32 %v1216, %v1217
    %v1219 = vsub.s32 4294967266, %v1214
    %v1220 = vadd.s32 %v1219, 127
    %v1221 = vshll.u32 %v1220, 23
    %v1222 = vor.u32 4788187, %v1221
    %v1223 = vand.u32 2147483647, %v1222
    %v1225 = vcvt.s32.f32 %v1218
    %v1226 = vmul.f32 %v1225, %v1223
    %v1227 = vxor.u32 %v1226, 2147483648
    %v1228 = vsel %vm1145, %v1227, %v1226
    %v1229 = vsub.s32 4, %v1205
    %v1230 = vsel %vm1145, %v1229, %v1205
    %v1231 = vsel %vm1144, %v107, %v1228
    %v1232 = vsel %vm1144, 0, %v1230
    %v1233 = vcosq.f32.pop %v1231
    %v1234 = vsinq.f32.pop %v1231
    %vm1235 = vweird.f32 %v107
    %v1236 = vand.u32 %v1232, 3
    %vm1237 = vcmp.lt.s32.totalorder %v1236, 2
    %vm1238 = vcmp.eq.s32.totalorder %v1236, 0
    %v1239 = vxor.u32 %v1234, 2147483648
    %v1240 = vsel %vm1238, %v1233, %v1239
    %vm1241 = vcmp.eq.s32.totalorder %v1236, 2
    %v1242 = vxor.u32 %v1233, 2147483648
    %v1243 = vsel %vm1241, %v1242, %v1234
    %v1244 = vsel %vm1237, %v1240, %v1243
    %v1245 = vsel %vm1235, nan, %v1244
    %v1246 = vand.u32 2147483647, %v108
    %vm1247 = vcmp.le.f32.partialorder %v1246, 0.7853982
    %vm1248 = vcmp.lt.s32.totalorder %v108, 0
    %v1249 = vand.u32 %v108, 2139095040
    %v1250 = vshrl.u32 %v1249, 23
    %v1251 = vsub.s32 %v1250, 127
    %v1252 = vand.u32 2147483647, %v108
    %v1253 = vand.u32 %v1252, 8388607
    %v1254 = vor.u32 %v1253, 8388608
    %v1255 = vsub.s32 0, %v1254
    %v1256 = vadd.s32 %v1251, 1
    %vm1257 = vcmp.gt.s32.totalorder %v1256, 0
    %v1258 = vsel %vm1257, %v1256, 0
    %v1259 = vshrl.u32 %v1258, 5
    %v1260 = vand.u32 %v1258, 31
    %v1261 = vsub.s32 32, %v1260
    %v1262 = vshrl.u32 683565275, %v1261
    %v1263 = vshll.u32 683565275, %v1260
    %v1264 = vshrl.u32 2475754826, %v1261
    %v1265 = vor.u32 %v1263, %v1264
    %v1266 = vshll.u32 2475754826, %v1260
    %v1267 = vshrl.u32 2131351028, %v1261
    %v1268 = vor.u32 %v1266, %v1267
    %v1269 = vshll.u32 2131351028, %v1260
    %v1270 = vshrl.u32 2102212464, %v1261
    %v1271 = vor.u32 %v1269, %v1270
    %v1272 = vshll.u32 2102212464, %v1260
    %v1273 = vshrl.u32 920167782, %v1261
    %v1274 = vor.u32 %v1272, %v1273
    %v1275 = vshll.u32 920167782, %v1260
    %v1276 = vshrl.u32 1326507024, %v1261
    %v1277 = vor.u32 %v1275, %v1276
    %vm1278 = vcmp.lt.s32.totalorder %v1259, 1
    %vm1279 = vcmp.lt.s32.totalorder %v1259, 2
    %vm1280 = vcmp.lt.s32.totalorder %v1259, 3
    %vm1281 = vcmp.lt.s32.totalorder %v1259, 4
    %v1282 = vsel %vm1278, %v1262, %v1265
    %v1283 = vsel %vm1281, %v1271, 2102212464
    %v1284 = vsel %vm1280, %v1268, %v1283
    %v1285 = vsel %vm1279, %v1282, %v1284
    %v1286 = vsel %vm1278, %v1265, %v1268
    %v1287 = vsel %vm1281, %v1274, 920167782
    %v1288 = vsel %vm1280, %v1271, %v1287
    %v1289 = vsel %vm1279, %v1286, %v1288
    %v1290 = vsel %vm1278, %v1268, %v1271
    %v1291 = vsel %vm1281, %v1277, 1326507024
    %v1292 = vsel %vm1280, %v1274, %v1291
    %v1293 = vsel %vm1279, %v1290, %v1292
    %v1294 = vshll.u32 %v1254, 8
    %v1295 = vmul.u32.u64.compose %v1294, %v1293
    %v1296 = vextract.low.u32 %v1295
    %v1297 = vextract.high.u32 %v1295
    %v1298 = vmul.u32.u64.compose %v1294, %v1289
    %v1299 = vextract.low.u32 %v1298
    %v1300 = vextract.high.u32 %v1298
    %v1301 = vmul.u32 %v1294, %v1285
    %v1302 = vadd.s32 %v1297, %v1299
    %vm1303 = vc.u32 %v1297, %v1299
    %v1304 = vadd.s32 %v1300, 1
    %v1305 = vsel %vm1303, %v1304, %v1300
    %v1306 = vadd.s32 %v1301, %v1305
    %v1307 = vadd.s32 %v1306, 536870912
    %v1308 = vshrl.u32 %v1307, 30
    %v1309 = vshll.u32 %v1308, 30
    %v1310 = vsub.s32 %v1306, %v1309
    %vm1311 = vcmp.lt.s32.totalorder %v1310, 0
    %v1312 = vsub.s32 0, %v1310
    %v1313 = vsel %vm1311, %v1312, %v1310
    %v1314 = vclz %v1313
    %v1315 = vsub.s32 %v1314, 2
    %vm1316 = vcmp.gt.s32.totalorder 0, %v1315
    %v1317 = vsel %vm1316, 0, %v1315
    %v1318 = vsub.s32 32, %v1317
    %v1319 = vshll.u32 %v1310, %v1317
    %v1320 = vshrl.u32 %v1302, %v1318
    %v1321 = vor.u32 %v1319, %v1320
    %v1322 = vsub.s32 4294967266, %v1317
    %v1323 = vadd.s32 %v1322, 127
    %v1324 = vshll.u32 %v1323, 23
    %v1325 = vor.u32 4788187, %v1324
    %v1326 = vand.u32 2147483647, %v1325
    %v1328 = vcvt.s32.f32 %v1321
    %v1329 = vmul.f32 %v1328, %v1326
    %v1330 = vxor.u32 %v1329, 2147483648
    %v1331 = vsel %vm1248, %v1330, %v1329
    %v1332 = vsub.s32 4, %v1308
    %v1333 = vsel %vm1248, %v1332, %v1308
    %v1334 = vsel %vm1247, %v108, %v1331
    %v1335 = vsel %vm1247, 0, %v1333
    %v1336 = vcosq.f32.pop %v1334
    %v1337 = vsinq.f32.pop %v1334
    %vm1338 = vweird.f32 %v108
    %v1339 = vand.u32 %v1335, 3
    %vm1340 = vcmp.lt.s32.totalorder %v1339, 2
    %vm1341 = vcmp.eq.s32.totalorder %v1339, 0
    %v1342 = vxor.u32 %v1337, 2147483648
    %v1343 = vsel %vm1341, %v1336, %v1342
    %vm1344 = vcmp.eq.s32.totalorder %v1339, 2
    %v1345 = vxor.u32 %v1336, 2147483648
    %v1346 = vsel %vm1344, %v1345, %v1337
    %v1347 = vsel %vm1340, %v1343, %v1346
    %v1348 = vsel %vm1338, nan, %v1347
    %v1349 = vand.u32 2147483647, %v109
    %vm1350 = vcmp.le.f32.partialorder %v1349, 0.7853982
    %vm1351 = vcmp.lt.s32.totalorder %v109, 0
    %v1352 = vand.u32 %v109, 2139095040
    %v1353 = vshrl.u32 %v1352, 23
    %v1354 = vsub.s32 %v1353, 127
    %v1355 = vand.u32 2147483647, %v109
    %v1356 = vand.u32 %v1355, 8388607
    %v1357 = vor.u32 %v1356, 8388608
    %v1358 = vsub.s32 0, %v1357
    %v1359 = vadd.s32 %v1354, 1
    %vm1360 = vcmp.gt.s32.totalorder %v1359, 0
    %v1361 = vsel %vm1360, %v1359, 0
    %v1362 = vshrl.u32 %v1361, 5
    %v1363 = vand.u32 %v1361, 31
    %v1364 = vsub.s32 32, %v1363
    %v1365 = vshrl.u32 683565275, %v1364
    %v1366 = vshll.u32 683565275, %v1363
    %v1367 = vshrl.u32 2475754826, %v1364
    %v1368 = vor.u32 %v1366, %v1367
    %v1369 = vshll.u32 2475754826, %v1363
    %v1370 = vshrl.u32 2131351028, %v1364
    %v1371 = vor.u32 %v1369, %v1370
    %v1372 = vshll.u32 2131351028, %v1363
    %v1373 = vshrl.u32 2102212464, %v1364
    %v1374 = vor.u32 %v1372, %v1373
    %v1375 = vshll.u32 2102212464, %v1363
    %v1376 = vshrl.u32 920167782, %v1364
    %v1377 = vor.u32 %v1375, %v1376
    %v1378 = vshll.u32 920167782, %v1363
    %v1379 = vshrl.u32 1326507024, %v1364
    %v1380 = vor.u32 %v1378, %v1379
    %vm1381 = vcmp.lt.s32.totalorder %v1362, 1
    %vm1382 = vcmp.lt.s32.totalorder %v1362, 2
    %vm1383 = vcmp.lt.s32.totalorder %v1362, 3
    %vm1384 = vcmp.lt.s32.totalorder %v1362, 4
    %v1385 = vsel %vm1381, %v1365, %v1368
    %v1386 = vsel %vm1384, %v1374, 2102212464
    %v1387 = vsel %vm1383, %v1371, %v1386
    %v1388 = vsel %vm1382, %v1385, %v1387
    %v1389 = vsel %vm1381, %v1368, %v1371
    %v1390 = vsel %vm1384, %v1377, 920167782
    %v1391 = vsel %vm1383, %v1374, %v1390
    %v1392 = vsel %vm1382, %v1389, %v1391
    %v1393 = vsel %vm1381, %v1371, %v1374
    %v1394 = vsel %vm1384, %v1380, 1326507024
    %v1395 = vsel %vm1383, %v1377, %v1394
    %v1396 = vsel %vm1382, %v1393, %v1395
    %v1397 = vshll.u32 %v1357, 8
    %v1398 = vmul.u32.u64.compose %v1397, %v1396
    %v1399 = vextract.low.u32 %v1398
    %v1400 = vextract.high.u32 %v1398
    %v1401 = vmul.u32.u64.compose %v1397, %v1392
    %v1402 = vextract.low.u32 %v1401
    %v1403 = vextract.high.u32 %v1401
    %v1404 = vmul.u32 %v1397, %v1388
    %v1405 = vadd.s32 %v1400, %v1402
    %vm1406 = vc.u32 %v1400, %v1402
    %v1407 = vadd.s32 %v1403, 1
    %v1408 = vsel %vm1406, %v1407, %v1403
    %v1409 = vadd.s32 %v1404, %v1408
    %v1410 = vadd.s32 %v1409, 536870912
    %v1411 = vshrl.u32 %v1410, 30
    %v1412 = vshll.u32 %v1411, 30
    %v1413 = vsub.s32 %v1409, %v1412
    %vm1414 = vcmp.lt.s32.totalorder %v1413, 0
    %v1415 = vsub.s32 0, %v1413
    %v1416 = vsel %vm1414, %v1415, %v1413
    %v1417 = vclz %v1416
    %v1418 = vsub.s32 %v1417, 2
    %vm1419 = vcmp.gt.s32.totalorder 0, %v1418
    %v1420 = vsel %vm1419, 0, %v1418
    %v1421 = vsub.s32 32, %v1420
    %v1422 = vshll.u32 %v1413, %v1420
    %v1423 = vshrl.u32 %v1405, %v1421
    %v1424 = vor.u32 %v1422, %v1423
    %v1425 = vsub.s32 4294967266, %v1420
    %v1426 = vadd.s32 %v1425, 127
    %v1427 = vshll.u32 %v1426, 23
    %v1428 = vor.u32 4788187, %v1427
    %v1429 = vand.u32 2147483647, %v1428
    %v1431 = vcvt.s32.f32 %v1424
    %v1432 = vmul.f32 %v1431, %v1429
    %v1433 = vxor.u32 %v1432, 2147483648
    %v1434 = vsel %vm1351, %v1433, %v1432
    %v1435 = vsub.s32 4, %v1411
    %v1436 = vsel %vm1351, %v1435, %v1411
    %v1437 = vsel %vm1350, %v109, %v1434
    %v1438 = vsel %vm1350, 0, %v1436
    %v1439 = vcosq.f32.pop %v1437
    %v1440 = vsinq.f32.pop %v1437
    %vm1441 = vweird.f32 %v109
    %v1442 = vand.u32 %v1438, 3
    %vm1443 = vcmp.lt.s32.totalorder %v1442, 2
    %vm1444 = vcmp.eq.s32.totalorder %v1442, 0
    %v1445 = vxor.u32 %v1440, 2147483648
    %v1446 = vsel %vm1444, %v1439, %v1445
    %vm1447 = vcmp.eq.s32.totalorder %v1442, 2
    %v1448 = vxor.u32 %v1439, 2147483648
    %v1449 = vsel %vm1447, %v1448, %v1440
    %v1450 = vsel %vm1443, %v1446, %v1449
    %v1451 = vsel %vm1441, nan, %v1450
    %v1452 = vand.u32 2147483647, %v110
    %vm1453 = vcmp.le.f32.partialorder %v1452, 0.7853982
    %vm1454 = vcmp.lt.s32.totalorder %v110, 0
    %v1455 = vand.u32 %v110, 2139095040
    %v1456 = vshrl.u32 %v1455, 23
    %v1457 = vsub.s32 %v1456, 127
    %v1458 = vand.u32 2147483647, %v110
    %v1459 = vand.u32 %v1458, 8388607
    %v1460 = vor.u32 %v1459, 8388608
    %v1461 = vsub.s32 0, %v1460
    %v1462 = vadd.s32 %v1457, 1
    %vm1463 = vcmp.gt.s32.totalorder %v1462, 0
    %v1464 = vsel %vm1463, %v1462, 0
    %v1465 = vshrl.u32 %v1464, 5
    %v1466 = vand.u32 %v1464, 31
    %v1467 = vsub.s32 32, %v1466
    %v1468 = vshrl.u32 683565275, %v1467
    %v1469 = vshll.u32 683565275, %v1466
    %v1470 = vshrl.u32 2475754826, %v1467
    %v1471 = vor.u32 %v1469, %v1470
    %v1472 = vshll.u32 2475754826, %v1466
    %v1473 = vshrl.u32 2131351028, %v1467
    %v1474 = vor.u32 %v1472, %v1473
    %v1475 = vshll.u32 2131351028, %v1466
    %v1476 = vshrl.u32 2102212464, %v1467
    %v1477 = vor.u32 %v1475, %v1476
    %v1478 = vshll.u32 2102212464, %v1466
    %v1479 = vshrl.u32 920167782, %v1467
    %v1480 = vor.u32 %v1478, %v1479
    %v1481 = vshll.u32 920167782, %v1466
    %v1482 = vshrl.u32 1326507024, %v1467
    %v1483 = vor.u32 %v1481, %v1482
    %vm1484 = vcmp.lt.s32.totalorder %v1465, 1
    %vm1485 = vcmp.lt.s32.totalorder %v1465, 2
    %vm1486 = vcmp.lt.s32.totalorder %v1465, 3
    %vm1487 = vcmp.lt.s32.totalorder %v1465, 4
    %v1488 = vsel %vm1484, %v1468, %v1471
    %v1489 = vsel %vm1487, %v1477, 2102212464
    %v1490 = vsel %vm1486, %v1474, %v1489
    %v1491 = vsel %vm1485, %v1488, %v1490
    %v1492 = vsel %vm1484, %v1471, %v1474
    %v1493 = vsel %vm1487, %v1480, 920167782
    %v1494 = vsel %vm1486, %v1477, %v1493
    %v1495 = vsel %vm1485, %v1492, %v1494
    %v1496 = vsel %vm1484, %v1474, %v1477
    %v1497 = vsel %vm1487, %v1483, 1326507024
    %v1498 = vsel %vm1486, %v1480, %v1497
    %v1499 = vsel %vm1485, %v1496, %v1498
    %v1500 = vshll.u32 %v1460, 8
    %v1501 = vmul.u32.u64.compose %v1500, %v1499
    %v1502 = vextract.low.u32 %v1501
    %v1503 = vextract.high.u32 %v1501
    %v1504 = vmul.u32.u64.compose %v1500, %v1495
    %v1505 = vextract.low.u32 %v1504
    %v1506 = vextract.high.u32 %v1504
    %v1507 = vmul.u32 %v1500, %v1491
    %v1508 = vadd.s32 %v1503, %v1505
    %vm1509 = vc.u32 %v1503, %v1505
    %v1510 = vadd.s32 %v1506, 1
    %v1511 = vsel %vm1509, %v1510, %v1506
    %v1512 = vadd.s32 %v1507, %v1511
    %v1513 = vadd.s32 %v1512, 536870912
    %v1514 = vshrl.u32 %v1513, 30
    %v1515 = vshll.u32 %v1514, 30
    %v1516 = vsub.s32 %v1512, %v1515
    %vm1517 = vcmp.lt.s32.totalorder %v1516, 0
    %v1518 = vsub.s32 0, %v1516
    %v1519 = vsel %vm1517, %v1518, %v1516
    %v1520 = vclz %v1519
    %v1521 = vsub.s32 %v1520, 2
    %vm1522 = vcmp.gt.s32.totalorder 0, %v1521
    %v1523 = vsel %vm1522, 0, %v1521
    %v1524 = vsub.s32 32, %v1523
    %v1525 = vshll.u32 %v1516, %v1523
    %v1526 = vshrl.u32 %v1508, %v1524
    %v1527 = vor.u32 %v1525, %v1526
    %v1528 = vsub.s32 4294967266, %v1523
    %v1529 = vadd.s32 %v1528, 127
    %v1530 = vshll.u32 %v1529, 23
    %v1531 = vor.u32 4788187, %v1530
    %v1532 = vand.u32 2147483647, %v1531
    %v1534 = vcvt.s32.f32 %v1527
    %v1535 = vmul.f32 %v1534, %v1532
    %v1536 = vxor.u32 %v1535, 2147483648
    %v1537 = vsel %vm1454, %v1536, %v1535
    %v1538 = vsub.s32 4, %v1514
    %v1539 = vsel %vm1454, %v1538, %v1514
    %v1540 = vsel %vm1453, %v110, %v1537
    %v1541 = vsel %vm1453, 0, %v1539
    %v1542 = vcosq.f32.pop %v1540
    %v1543 = vsinq.f32.pop %v1540
    %vm1544 = vweird.f32 %v110
    %v1545 = vand.u32 %v1541, 3
    %vm1546 = vcmp.lt.s32.totalorder %v1545, 2
    %vm1547 = vcmp.eq.s32.totalorder %v1545, 0
    %v1548 = vxor.u32 %v1543, 2147483648
    %v1549 = vsel %vm1547, %v1542, %v1548
    %vm1550 = vcmp.eq.s32.totalorder %v1545, 2
    %v1551 = vxor.u32 %v1542, 2147483648
    %v1552 = vsel %vm1550, %v1551, %v1543
    %v1553 = vsel %vm1546, %v1549, %v1552
    %v1554 = vsel %vm1544, nan, %v1553
    %v1555 = vand.u32 2147483647, %v111
    %vm1556 = vcmp.le.f32.partialorder %v1555, 0.7853982
    %vm1557 = vcmp.lt.s32.totalorder %v111, 0
    %v1558 = vand.u32 %v111, 2139095040
    %v1559 = vshrl.u32 %v1558, 23
    %v1560 = vsub.s32 %v1559, 127
    %v1561 = vand.u32 2147483647, %v111
    %v1562 = vand.u32 %v1561, 8388607
    %v1563 = vor.u32 %v1562, 8388608
    %v1564 = vsub.s32 0, %v1563
    %v1565 = vadd.s32 %v1560, 1
    %vm1566 = vcmp.gt.s32.totalorder %v1565, 0
    %v1567 = vsel %vm1566, %v1565, 0
    %v1568 = vshrl.u32 %v1567, 5
    %v1569 = vand.u32 %v1567, 31
    %v1570 = vsub.s32 32, %v1569
    %v1571 = vshrl.u32 683565275, %v1570
    %v1572 = vshll.u32 683565275, %v1569
    %v1573 = vshrl.u32 2475754826, %v1570
    %v1574 = vor.u32 %v1572, %v1573
    %v1575 = vshll.u32 2475754826, %v1569
    %v1576 = vshrl.u32 2131351028, %v1570
    %v1577 = vor.u32 %v1575, %v1576
    %v1578 = vshll.u32 2131351028, %v1569
    %v1579 = vshrl.u32 2102212464, %v1570
    %v1580 = vor.u32 %v1578, %v1579
    %v1581 = vshll.u32 2102212464, %v1569
    %v1582 = vshrl.u32 920167782, %v1570
    %v1583 = vor.u32 %v1581, %v1582
    %v1584 = vshll.u32 920167782, %v1569
    %v1585 = vshrl.u32 1326507024, %v1570
    %v1586 = vor.u32 %v1584, %v1585
    %vm1587 = vcmp.lt.s32.totalorder %v1568, 1
    %vm1588 = vcmp.lt.s32.totalorder %v1568, 2
    %vm1589 = vcmp.lt.s32.totalorder %v1568, 3
    %vm1590 = vcmp.lt.s32.totalorder %v1568, 4
    %v1591 = vsel %vm1587, %v1571, %v1574
    %v1592 = vsel %vm1590, %v1580, 2102212464
    %v1593 = vsel %vm1589, %v1577, %v1592
    %v1594 = vsel %vm1588, %v1591, %v1593
    %v1595 = vsel %vm1587, %v1574, %v1577
    %v1596 = vsel %vm1590, %v1583, 920167782
    %v1597 = vsel %vm1589, %v1580, %v1596
    %v1598 = vsel %vm1588, %v1595, %v1597
    %v1599 = vsel %vm1587, %v1577, %v1580
    %v1600 = vsel %vm1590, %v1586, 1326507024
    %v1601 = vsel %vm1589, %v1583, %v1600
    %v1602 = vsel %vm1588, %v1599, %v1601
    %v1603 = vshll.u32 %v1563, 8
    %v1604 = vmul.u32.u64.compose %v1603, %v1602
    %v1605 = vextract.low.u32 %v1604
    %v1606 = vextract.high.u32 %v1604
    %v1607 = vmul.u32.u64.compose %v1603, %v1598
    %v1608 = vextract.low.u32 %v1607
    %v1609 = vextract.high.u32 %v1607
    %v1610 = vmul.u32 %v1603, %v1594
    %v1611 = vadd.s32 %v1606, %v1608
    %vm1612 = vc.u32 %v1606, %v1608
    %v1613 = vadd.s32 %v1609, 1
    %v1614 = vsel %vm1612, %v1613, %v1609
    %v1615 = vadd.s32 %v1610, %v1614
    %v1616 = vadd.s32 %v1615, 536870912
    %v1617 = vshrl.u32 %v1616, 30
    %v1618 = vshll.u32 %v1617, 30
    %v1619 = vsub.s32 %v1615, %v1618
    %vm1620 = vcmp.lt.s32.totalorder %v1619, 0
    %v1621 = vsub.s32 0, %v1619
    %v1622 = vsel %vm1620, %v1621, %v1619
    %v1623 = vclz %v1622
    %v1624 = vsub.s32 %v1623, 2
    %vm1625 = vcmp.gt.s32.totalorder 0, %v1624
    %v1626 = vsel %vm1625, 0, %v1624
    %v1627 = vsub.s32 32, %v1626
    %v1628 = vshll.u32 %v1619, %v1626
    %v1629 = vshrl.u32 %v1611, %v1627
    %v1630 = vor.u32 %v1628, %v1629
    %v1631 = vsub.s32 4294967266, %v1626
    %v1632 = vadd.s32 %v1631, 127
    %v1633 = vshll.u32 %v1632, 23
    %v1634 = vor.u32 4788187, %v1633
    %v1635 = vand.u32 2147483647, %v1634
    %v1637 = vcvt.s32.f32 %v1630
    %v1638 = vmul.f32 %v1637, %v1635
    %v1639 = vxor.u32 %v1638, 2147483648
    %v1640 = vsel %vm1557, %v1639, %v1638
    %v1641 = vsub.s32 4, %v1617
    %v1642 = vsel %vm1557, %v1641, %v1617
    %v1643 = vsel %vm1556, %v111, %v1640
    %v1644 = vsel %vm1556, 0, %v1642
    %v1645 = vcosq.f32.pop %v1643
    %v1646 = vsinq.f32.pop %v1643
    %vm1647 = vweird.f32 %v111
    %v1648 = vand.u32 %v1644, 3
    %vm1649 = vcmp.lt.s32.totalorder %v1648, 2
    %vm1650 = vcmp.eq.s32.totalorder %v1648, 0
    %v1651 = vxor.u32 %v1646, 2147483648
    %v1652 = vsel %vm1650, %v1645, %v1651
    %vm1653 = vcmp.eq.s32.totalorder %v1648, 2
    %v1654 = vxor.u32 %v1645, 2147483648
    %v1655 = vsel %vm1653, %v1654, %v1646
    %v1656 = vsel %vm1649, %v1652, %v1655
    %v1657 = vsel %vm1647, nan, %v1656
    %v1658 = vand.u32 2147483647, %v112
    %vm1659 = vcmp.le.f32.partialorder %v1658, 0.7853982
    %vm1660 = vcmp.lt.s32.totalorder %v112, 0
    %v1661 = vand.u32 %v112, 2139095040
    %v1662 = vshrl.u32 %v1661, 23
    %v1663 = vsub.s32 %v1662, 127
    %v1664 = vand.u32 2147483647, %v112
    %v1665 = vand.u32 %v1664, 8388607
    %v1666 = vor.u32 %v1665, 8388608
    %v1667 = vsub.s32 0, %v1666
    %v1668 = vadd.s32 %v1663, 1
    %vm1669 = vcmp.gt.s32.totalorder %v1668, 0
    %v1670 = vsel %vm1669, %v1668, 0
    %v1671 = vshrl.u32 %v1670, 5
    %v1672 = vand.u32 %v1670, 31
    %v1673 = vsub.s32 32, %v1672
    %v1674 = vshrl.u32 683565275, %v1673
    %v1675 = vshll.u32 683565275, %v1672
    %v1676 = vshrl.u32 2475754826, %v1673
    %v1677 = vor.u32 %v1675, %v1676
    %v1678 = vshll.u32 2475754826, %v1672
    %v1679 = vshrl.u32 2131351028, %v1673
    %v1680 = vor.u32 %v1678, %v1679
    %v1681 = vshll.u32 2131351028, %v1672
    %v1682 = vshrl.u32 2102212464, %v1673
    %v1683 = vor.u32 %v1681, %v1682
    %v1684 = vshll.u32 2102212464, %v1672
    %v1685 = vshrl.u32 920167782, %v1673
    %v1686 = vor.u32 %v1684, %v1685
    %v1687 = vshll.u32 920167782, %v1672
    %v1688 = vshrl.u32 1326507024, %v1673
    %v1689 = vor.u32 %v1687, %v1688
    %vm1690 = vcmp.lt.s32.totalorder %v1671, 1
    %vm1691 = vcmp.lt.s32.totalorder %v1671, 2
    %vm1692 = vcmp.lt.s32.totalorder %v1671, 3
    %vm1693 = vcmp.lt.s32.totalorder %v1671, 4
    %v1694 = vsel %vm1690, %v1674, %v1677
    %v1695 = vsel %vm1693, %v1683, 2102212464
    %v1696 = vsel %vm1692, %v1680, %v1695
    %v1697 = vsel %vm1691, %v1694, %v1696
    %v1698 = vsel %vm1690, %v1677, %v1680
    %v1699 = vsel %vm1693, %v1686, 920167782
    %v1700 = vsel %vm1692, %v1683, %v1699
    %v1701 = vsel %vm1691, %v1698, %v1700
    %v1702 = vsel %vm1690, %v1680, %v1683
    %v1703 = vsel %vm1693, %v1689, 1326507024
    %v1704 = vsel %vm1692, %v1686, %v1703
    %v1705 = vsel %vm1691, %v1702, %v1704
    %v1706 = vshll.u32 %v1666, 8
    %v1707 = vmul.u32.u64.compose %v1706, %v1705
    %v1708 = vextract.low.u32 %v1707
    %v1709 = vextract.high.u32 %v1707
    %v1710 = vmul.u32.u64.compose %v1706, %v1701
    %v1711 = vextract.low.u32 %v1710
    %v1712 = vextract.high.u32 %v1710
    %v1713 = vmul.u32 %v1706, %v1697
    %v1714 = vadd.s32 %v1709, %v1711
    %vm1715 = vc.u32 %v1709, %v1711
    %v1716 = vadd.s32 %v1712, 1
    %v1717 = vsel %vm1715, %v1716, %v1712
    %v1718 = vadd.s32 %v1713, %v1717
    %v1719 = vadd.s32 %v1718, 536870912
    %v1720 = vshrl.u32 %v1719, 30
    %v1721 = vshll.u32 %v1720, 30
    %v1722 = vsub.s32 %v1718, %v1721
    %vm1723 = vcmp.lt.s32.totalorder %v1722, 0
    %v1724 = vsub.s32 0, %v1722
    %v1725 = vsel %vm1723, %v1724, %v1722
    %v1726 = vclz %v1725
    %v1727 = vsub.s32 %v1726, 2
    %vm1728 = vcmp.gt.s32.totalorder 0, %v1727
    %v1729 = vsel %vm1728, 0, %v1727
    %v1730 = vsub.s32 32, %v1729
    %v1731 = vshll.u32 %v1722, %v1729
    %v1732 = vshrl.u32 %v1714, %v1730
    %v1733 = vor.u32 %v1731, %v1732
    %v1734 = vsub.s32 4294967266, %v1729
    %v1735 = vadd.s32 %v1734, 127
    %v1736 = vshll.u32 %v1735, 23
    %v1737 = vor.u32 4788187, %v1736
    %v1738 = vand.u32 2147483647, %v1737
    %v1740 = vcvt.s32.f32 %v1733
    %v1741 = vmul.f32 %v1740, %v1738
    %v1742 = vxor.u32 %v1741, 2147483648
    %v1743 = vsel %vm1660, %v1742, %v1741
    %v1744 = vsub.s32 4, %v1720
    %v1745 = vsel %vm1660, %v1744, %v1720
    %v1746 = vsel %vm1659, %v112, %v1743
    %v1747 = vsel %vm1659, 0, %v1745
    %v1748 = vcosq.f32.pop %v1746
    %v1749 = vsinq.f32.pop %v1746
    %vm1750 = vweird.f32 %v112
    %v1751 = vand.u32 %v1747, 3
    %vm1752 = vcmp.lt.s32.totalorder %v1751, 2
    %vm1753 = vcmp.eq.s32.totalorder %v1751, 0
    %v1754 = vxor.u32 %v1749, 2147483648
    %v1755 = vsel %vm1753, %v1748, %v1754
    %vm1756 = vcmp.eq.s32.totalorder %v1751, 2
    %v1757 = vxor.u32 %v1748, 2147483648
    %v1758 = vsel %vm1756, %v1757, %v1749
    %v1759 = vsel %vm1752, %v1755, %v1758
    %v1760 = vsel %vm1750, nan, %v1759
    %1761 = vst [vmem:[%s1] sm:$0xff] %v215
    %1762 = vst [vmem:[%s1 + $0x8] sm:$0xff] %v318
    %1763 = vst [vmem:[%s1 + $0x10] sm:$0xff] %v421
    %1764 = vst [vmem:[%s1 + $0x18] sm:$0xff] %v524
    %1765 = vst [vmem:[%s1 + $0x20] sm:$0xff] %v627
    %1766 = vst [vmem:[%s1 + $0x28] sm:$0xff] %v730
    %1767 = vst [vmem:[%s1 + $0x30] sm:$0xff] %v833
    %1768 = vst [vmem:[%s1 + $0x38] sm:$0xff] %v936
    %1769 = vst [vmem:[%s1 + $0x40] sm:$0xff] %v1039
    %1770 = vst [vmem:[%s1 + $0x48] sm:$0xff] %v1142
    %1771 = vst [vmem:[%s1 + $0x50] sm:$0xff] %v1245
    %1772 = vst [vmem:[%s1 + $0x58] sm:$0xff] %v1348
    %1773 = vst [vmem:[%s1 + $0x60] sm:$0xff] %v1451
    %1774 = vst [vmem:[%s1 + $0x68] sm:$0xff] %v1554
    %1775 = vst [vmem:[%s1 + $0x70] sm:$0xff] %v1657
    %1776 = vst [vmem:[%s1 + $0x78] sm:$0xff] %v1760
    // Predicated region
    $region10: #{_build_cos_sin_cache.1} parent=1 // pred_check
      _
    $region11: #{_build_cos_sin_cache.1} parent=1 // pred_check_branch
      %1778 = sbr.rel (0) target = $region13
    $region12: #{_build_cos_sin_cache.1} parent=1 // pred_region
      _
    $region13: #{_build_cos_sin_cache.1} parent=1 // pred_fallthru
      _
    // Predicated region
    $region14: #{_build_cos_sin_cache.1} parent=1 // pred_check
      _
    $region15: #{_build_cos_sin_cache.1} parent=1 // pred_check_branch
      %1780 = sbr.rel (0) target = $region17
    $region16: #{_build_cos_sin_cache.1} parent=1 // pred_region
      _
    $region17: #{_build_cos_sin_cache.1} parent=1 // pred_fallthru
      _
    %1781 = vsyncpa [#allocation3], 1

</llo_original>
